<compile_context>
chip_gen: v7x
topology: tpu7x:2x2x1
jax: 0.10.0
libtpu: 0.0.40
codegen_flags: <defaults>
</compile_context>

<pallas_src>
import jax
import jax.numpy as jnp
from jax.experimental import pallas as pl
from jax.experimental.pallas import tpu as pltpu

H = W = 16        # spatial
HW = H * W
CIN = 3           # image channels (vision backbone convention)
CMID = 32         # backbone conv width
KH = KW = 3       # conv kernel
KTAP = KH * KW * CIN   # 27 im2col features
KPAD = 128        # lane-dense padded im2col K
CPAD = 128        # lane-dense padded conv-channel dim


def crop_model_kernel(p_ref, wc_ref, bc_ref, wfc_ref, bfc_ref,
                      w1_ref, b1_ref, w2_ref, b2_ref, o_ref):
    tb = p_ref.shape[0]

    # ---- backbone stand-in: im2col conv (single MXU matmul) -> ReLU -> GAP -> fc
    # TODO(synk): pretrained torchvision backbone replaced by this deterministic stand-in.
    p = p_ref[...].reshape(tb * HW, KPAD)                       # bf16, lane-dense
    acc = jnp.dot(p, wc_ref[...], preferred_element_type=jnp.float32)  # (tb*HW, CPAD)
    acc = jnp.maximum(acc + bc_ref[...], 0.0)                   # ReLU
    # global average pool: 1/(H*W) is folded into wfc in the wrapper
    feat = jnp.sum(acc.reshape(tb, HW, CPAD), axis=1)           # (tb, CPAD)
    z = jnp.dot(feat, wfc_ref[...],
                preferred_element_type=jnp.float32) + bfc_ref[...]     # (tb, 4)

    # ---- head: dropout -> fc1 -> relu -> dropout -> fc2 -> sigmoid
    # TODO(synk): dropout(p=0.2) implemented as eval-mode identity (no RNG mask).
    h = jnp.dot(z, w1_ref[...], preferred_element_type=jnp.float32) + b1_ref[...]
    h = jnp.maximum(h, 0.0)                                     # ReLU, (tb, 16)
    y = jnp.dot(h, w2_ref[...], preferred_element_type=jnp.float32) + b2_ref[...]
    o_ref[...] = pl.reciprocal(1.0 + jnp.exp(-y), approx=True)  # sigmoid, (tb, 4)


def crop_model_forward(x_nchw, params, tb=None):
    wc, bc, wfc, bfc, w1, b1, w2, b2 = params
    B = x_nchw.shape[0]
    if tb is None:
        # cap TB so 2x bf16 input buffers + f32 intermediates fit v7x VMEM
        tb = 64 if B >= 64 else max(8, int(pl.next_power_of_2(B)))
    bp = pl.cdiv(B, tb) * tb

    # ---- wrapper-side layout work: NCHW -> NHWC, 'same' pad, im2col, lane pad
    x = jnp.transpose(x_nchw, (0, 2, 3, 1)).astype(jnp.float32)     # (B, H, W, CIN)
    xp = jnp.pad(x, ((0, bp - B), (1, 1), (1, 1), (0, 0)))          # batch + spatial pad
    taps = [xp[:, kh:kh + H, kw:kw + W, :] for kh in range(KH) for kw in range(KW)]
    patches = jnp.concatenate(taps, axis=-1).reshape(bp, HW, KTAP)  # (bp, 256, 27)
    patches = jnp.pad(patches, ((0, 0), (0, 0), (0, KPAD - KTAP)))
    patches = patches.astype(jnp.bfloat16)                          # (bp, 256, 128)

    # ---- weight prep: flatten/pad conv weight, pad channel dim, fold GAP scale
    wcf = wc.reshape(KTAP, CMID)
    wcf = jnp.pad(wcf, ((0, KPAD - KTAP), (0, CPAD - CMID))).astype(jnp.bfloat16)
    bcp = jnp.pad(bc, ((0, 0), (0, CPAD - CMID)))                   # (1, 128)
    wfcp = jnp.pad(wfc / float(HW), ((0, CPAD - CMID), (0, 0)))     # (128, 4), GAP folded

    def full(a):
        return pl.BlockSpec(a.shape, lambda b, _n=a.ndim: (0,) * _n)

    out = pl.pallas_call(
        crop_model_kernel,
        out_shape=jax.ShapeDtypeStruct((bp, 4), jnp.float32),
        grid=(bp // tb,),
        in_specs=[
            pl.BlockSpec((tb, HW, KPAD), lambda b: (b, 0, 0)),
            full(wcf), full(bcp), full(wfcp), full(bfc),
            full(w1), full(b1), full(w2), full(b2),
        ],
        out_specs=pl.BlockSpec((tb, 4), lambda b: (b, 0)),          # per-tile block store
        compiler_params=pltpu.CompilerParams(
            dimension_semantics=("parallel",)),                     # megacore-shardable
    )(patches, wcf, bcp, wfcp, bfc, w1, b1, w2, b2)
    return out[:B]


def crop_model_reference(x_nchw, params):
    """Pure-JAX f32 reference of the same forward pass."""
    wc, bc, wfc, bfc, w1, b1, w2, b2 = params
    x = jnp.transpose(x_nchw, (0, 2, 3, 1)).astype(jnp.float32)
    xp = jnp.pad(x, ((0, 0), (1, 1), (1, 1), (0, 0)))
    B = x.shape[0]
    acc = jnp.zeros((B, H, W, CMID), jnp.float32)
    for kh in range(KH):
        for kw in range(KW):
            acc = acc + jnp.einsum('bhwc,cd->bhwd',
                                   xp[:, kh:kh + H, kw:kw + W, :], wc[kh, kw])
    acc = jnp.maximum(acc + bc.reshape(1, 1, 1, CMID), 0.0)
    feat = jnp.mean(acc, axis=(1, 2))
    z = feat @ wfc + bfc
    h = jnp.maximum(z @ w1 + b1, 0.0)
    y = h @ w2 + b2
    return jax.nn.sigmoid(y)


def init_params(key):
    ks = jax.random.split(key, 8)
    wc = jax.random.normal(ks[0], (KH, KW, CIN, CMID), jnp.float32) * 0.1
    bc = jnp.zeros((1, CMID), jnp.float32)
    wfc = jax.random.normal(ks[1], (CMID, 4), jnp.float32) * 0.1       # backbone final fc
    bfc = jax.random.normal(ks[2], (1, 4), jnp.float32) * 0.1
    w1 = jax.random.normal(ks[3], (4, 16), jnp.float32) * 0.5          # nn.Linear(4, 16)
    b1 = jax.random.normal(ks[4], (1, 16), jnp.float32) * 0.1
    w2 = jax.random.normal(ks[5], (16, 4), jnp.float32) * 0.25         # nn.Linear(16, 4)
    b2 = jax.random.normal(ks[6], (1, 4), jnp.float32) * 0.1
    return (wc, bc, wfc, bfc, w1, b1, w2, b2)


if __name__ == "__main__":
    key = jax.random.PRNGKey(0)
    kx, kp = jax.random.split(key)
    x = jax.random.normal(kx, (2, CIN, H, W), jnp.float32)   # NCHW, like the PyTorch module
    params = init_params(kp)

    out = crop_model_forward(x, params)
    jax.block_until_ready(out)

    assert out.shape == (2, 4)
    assert bool(jnp.all((out >= 0.0) & (out <= 1.0)))        # sigmoid range sanity check

    ref = crop_model_reference(x, params)
    assert bool(jnp.allclose(out, ref, atol=2e-2, rtol=2e-2))  # bf16-conv tolerance
    print("KERNEL_OK")
</pallas_src>

<mosaic_0001>
module attributes {stable_mosaic.version = 11 : i64} {
  func.func @crop_model_kernel(%arg0: i32, %arg1: memref<8x256x128xbf16, #tpu.memory_space<vmem>>, %arg2: memref<128x128xbf16, #tpu.memory_space<vmem>>, %arg3: memref<1x128xf32, #tpu.memory_space<vmem>>, %arg4: memref<128x4xf32, #tpu.memory_space<vmem>>, %arg5: memref<1x4xf32, #tpu.memory_space<vmem>>, %arg6: memref<4x16xf32, #tpu.memory_space<vmem>>, %arg7: memref<1x16xf32, #tpu.memory_space<vmem>>, %arg8: memref<16x4xf32, #tpu.memory_space<vmem>>, %arg9: memref<1x4xf32, #tpu.memory_space<vmem>>, %arg10: memref<8x4xf32, #tpu.memory_space<vmem>>) attributes {dimension_semantics = [#tpu.dimension_semantics<parallel>], iteration_bounds = array<i64: 1>, scalar_prefetch = 0 : i64, scratch_operands = 0 : i64, tpu.core_type = #tpu.core_type<tc>, window_params = [{transform_indices = @transform_0, window_bounds = array<i64: 8, 256, 128>}, {pipeline_mode = #tpu.pipeline_mode<synchronous>, transform_indices = @transform_1, window_bounds = array<i64: 128, 128>}, {pipeline_mode = #tpu.pipeline_mode<synchronous>, transform_indices = @transform_2, window_bounds = array<i64: 1, 128>}, {pipeline_mode = #tpu.pipeline_mode<synchronous>, transform_indices = @transform_3, window_bounds = array<i64: 128, 4>}, {pipeline_mode = #tpu.pipeline_mode<synchronous>, transform_indices = @transform_4, window_bounds = array<i64: 1, 4>}, {pipeline_mode = #tpu.pipeline_mode<synchronous>, transform_indices = @transform_5, window_bounds = array<i64: 4, 16>}, {pipeline_mode = #tpu.pipeline_mode<synchronous>, transform_indices = @transform_6, window_bounds = array<i64: 1, 16>}, {pipeline_mode = #tpu.pipeline_mode<synchronous>, transform_indices = @transform_7, window_bounds = array<i64: 16, 4>}, {pipeline_mode = #tpu.pipeline_mode<synchronous>, transform_indices = @transform_8, window_bounds = array<i64: 1, 4>}, {transform_indices = @transform_9, window_bounds = array<i64: 8, 4>}]} {
    %c0 = arith.constant 0 : index
    %c0_0 = arith.constant 0 : index
    %c0_1 = arith.constant 0 : index
    %0 = vector.load %arg1[%c0, %c0_0, %c0_1] : memref<8x256x128xbf16, #tpu.memory_space<vmem>>, vector<8x256x128xbf16>
    %1 = vector.shape_cast %0 : vector<8x256x128xbf16> to vector<2048x128xbf16>
    %c0_2 = arith.constant 0 : index
    %c0_3 = arith.constant 0 : index
    %2 = vector.load %arg2[%c0_2, %c0_3] : memref<128x128xbf16, #tpu.memory_space<vmem>>, vector<128x128xbf16>
    %cst = arith.constant dense<0.000000e+00> : vector<2048x128xf32>
    %3 = tpu.matmul %1, %2, %cst {dimension_numbers = #tpu.dot_dimension_numbers<[1], [0], [0], [1], [0, 0, 1, 1], [], []>} : vector<2048x128xbf16>, vector<128x128xbf16>, vector<2048x128xf32> -> vector<2048x128xf32>
    %c0_4 = arith.constant 0 : index
    %c0_5 = arith.constant 0 : index
    %4 = vector.load %arg3[%c0_4, %c0_5] : memref<1x128xf32, #tpu.memory_space<vmem>>, vector<1x128xf32>
    %5 = vector.broadcast %4 : vector<1x128xf32> to vector<2048x128xf32>
    %6 = arith.addf %3, %5 : vector<2048x128xf32>
    %cst_6 = arith.constant 0.000000e+00 : f32
    %7 = vector.broadcast %cst_6 : f32 to vector<2048x128xf32>
    %8 = arith.maximumf %6, %7 : vector<2048x128xf32>
    %9 = vector.shape_cast %8 : vector<2048x128xf32> to vector<8x256x128xf32>
    %cst_7 = arith.constant dense<0.000000e+00> : vector<8x128xf32>
    %10 = vector.multi_reduction <add>, %9, %cst_7 [1] : vector<8x256x128xf32> to vector<8x128xf32>
    %c0_8 = arith.constant 0 : index
    %c0_9 = arith.constant 0 : index
    %11 = vector.load %arg4[%c0_8, %c0_9] : memref<128x4xf32, #tpu.memory_space<vmem>>, vector<128x4xf32>
    %cst_10 = arith.constant dense<0.000000e+00> : vector<8x4xf32>
    %12 = tpu.matmul %10, %11, %cst_10 {dimension_numbers = #tpu.dot_dimension_numbers<[1], [0], [0], [1], [0, 0, 1, 1], [], []>} : vector<8x128xf32>, vector<128x4xf32>, vector<8x4xf32> -> vector<8x4xf32>
    %c0_11 = arith.constant 0 : index
    %c0_12 = arith.constant 0 : index
    %13 = vector.load %arg5[%c0_11, %c0_12] : memref<1x4xf32, #tpu.memory_space<vmem>>, vector<1x4xf32>
    %14 = vector.broadcast %13 : vector<1x4xf32> to vector<8x4xf32>
    %15 = arith.addf %12, %14 : vector<8x4xf32>
    %c0_13 = arith.constant 0 : index
    %c0_14 = arith.constant 0 : index
    %16 = vector.load %arg6[%c0_13, %c0_14] : memref<4x16xf32, #tpu.memory_space<vmem>>, vector<4x16xf32>
    %cst_15 = arith.constant dense<0.000000e+00> : vector<8x16xf32>
    %17 = tpu.matmul %15, %16, %cst_15 {dimension_numbers = #tpu.dot_dimension_numbers<[1], [0], [0], [1], [0, 0, 1, 1], [], []>} : vector<8x4xf32>, vector<4x16xf32>, vector<8x16xf32> -> vector<8x16xf32>
    %c0_16 = arith.constant 0 : index
    %c0_17 = arith.constant 0 : index
    %18 = vector.load %arg7[%c0_16, %c0_17] : memref<1x16xf32, #tpu.memory_space<vmem>>, vector<1x16xf32>
    %19 = vector.broadcast %18 : vector<1x16xf32> to vector<8x16xf32>
    %20 = arith.addf %17, %19 : vector<8x16xf32>
    %cst_18 = arith.constant 0.000000e+00 : f32
    %21 = vector.broadcast %cst_18 : f32 to vector<8x16xf32>
    %22 = arith.maximumf %20, %21 : vector<8x16xf32>
    %c0_19 = arith.constant 0 : index
    %c0_20 = arith.constant 0 : index
    %23 = vector.load %arg8[%c0_19, %c0_20] : memref<16x4xf32, #tpu.memory_space<vmem>>, vector<16x4xf32>
    %cst_21 = arith.constant dense<0.000000e+00> : vector<8x4xf32>
    %24 = tpu.matmul %22, %23, %cst_21 {dimension_numbers = #tpu.dot_dimension_numbers<[1], [0], [0], [1], [0, 0, 1, 1], [], []>} : vector<8x16xf32>, vector<16x4xf32>, vector<8x4xf32> -> vector<8x4xf32>
    %c0_22 = arith.constant 0 : index
    %c0_23 = arith.constant 0 : index
    %25 = vector.load %arg9[%c0_22, %c0_23] : memref<1x4xf32, #tpu.memory_space<vmem>>, vector<1x4xf32>
    %26 = vector.broadcast %25 : vector<1x4xf32> to vector<8x4xf32>
    %27 = arith.addf %24, %26 : vector<8x4xf32>
    %cst_24 = arith.constant 0.000000e+00 : f32
    %28 = vector.broadcast %cst_24 : f32 to vector<8x4xf32>
    %29 = arith.subf %28, %27 : vector<8x4xf32>
    %30 = math.exp %29 : vector<8x4xf32>
    %cst_25 = arith.constant 1.000000e+00 : f32
    %31 = vector.broadcast %cst_25 : f32 to vector<8x4xf32>
    %32 = arith.addf %31, %30 : vector<8x4xf32>
    %33 = tpu.reciprocal %32 {approx = true} : vector<8x4xf32> -> vector<8x4xf32>
    %c0_26 = arith.constant 0 : index
    %c0_27 = arith.constant 0 : index
    %34 = vector.load %arg10[%c0_26, %c0_27] : memref<8x4xf32, #tpu.memory_space<vmem>>, vector<8x4xf32>
    tpu.vector_store %arg10[%c0_26, %c0_27], %33 {strides = array<i32>} : memref<8x4xf32, #tpu.memory_space<vmem>>, vector<8x4xf32>,
    return
  }
  func.func @transform_0(%arg0: i32) -> (i32, i32, i32) {
    %c0_i32 = arith.constant 0 : i32
    %c0_i32_0 = arith.constant 0 : i32
    %c0_i32_1 = arith.constant 0 : i32
    return %arg0, %c0_i32, %c0_i32_0 : i32, i32, i32
  }
  func.func @transform_1(%arg0: i32) -> (i32, i32) {
    %c0_i32 = arith.constant 0 : i32
    %c0_i32_0 = arith.constant 0 : i32
    %c0_i32_1 = arith.constant 0 : i32
    return %c0_i32, %c0_i32_0 : i32, i32
  }
  func.func @transform_2(%arg0: i32) -> (i32, i32) {
    %c0_i32 = arith.constant 0 : i32
    %c0_i32_0 = arith.constant 0 : i32
    %c0_i32_1 = arith.constant 0 : i32
    return %c0_i32, %c0_i32_0 : i32, i32
  }
  func.func @transform_3(%arg0: i32) -> (i32, i32) {
    %c0_i32 = arith.constant 0 : i32
    %c0_i32_0 = arith.constant 0 : i32
    %c0_i32_1 = arith.constant 0 : i32
    return %c0_i32, %c0_i32_0 : i32, i32
  }
  func.func @transform_4(%arg0: i32) -> (i32, i32) {
    %c0_i32 = arith.constant 0 : i32
    %c0_i32_0 = arith.constant 0 : i32
    %c0_i32_1 = arith.constant 0 : i32
    return %c0_i32, %c0_i32_0 : i32, i32
  }
  func.func @transform_5(%arg0: i32) -> (i32, i32) {
    %c0_i32 = arith.constant 0 : i32
    %c0_i32_0 = arith.constant 0 : i32
    %c0_i32_1 = arith.constant 0 : i32
    return %c0_i32, %c0_i32_0 : i32, i32
  }
  func.func @transform_6(%arg0: i32) -> (i32, i32) {
    %c0_i32 = arith.constant 0 : i32
    %c0_i32_0 = arith.constant 0 : i32
    %c0_i32_1 = arith.constant 0 : i32
    return %c0_i32, %c0_i32_0 : i32, i32
  }
  func.func @transform_7(%arg0: i32) -> (i32, i32) {
    %c0_i32 = arith.constant 0 : i32
    %c0_i32_0 = arith.constant 0 : i32
    %c0_i32_1 = arith.constant 0 : i32
    return %c0_i32, %c0_i32_0 : i32, i32
  }
  func.func @transform_8(%arg0: i32) -> (i32, i32) {
    %c0_i32 = arith.constant 0 : i32
    %c0_i32_0 = arith.constant 0 : i32
    %c0_i32_1 = arith.constant 0 : i32
    return %c0_i32, %c0_i32_0 : i32, i32
  }
  func.func @transform_9(%arg0: i32) -> (i32, i32) {
    %c0_i32 = arith.constant 0 : i32
    %c0_i32_0 = arith.constant 0 : i32
    return %arg0, %c0_i32 : i32, i32
  }
}

</mosaic_0001>

<llo_original>
// kernel: tpu_custom_call.1
$region0: #{tpu_custom_call.1}
  #allocation0 [shape = 'u32[]', space=smem, size = 0x4, offset = 0x4, fixed_abs, tag = 'smem constant byte address 0x4 - core index']
  #allocation1 [shape = 'u32[144,128]{1,0:T(1,128)}', space=vmem, size = 0x12000, scoped, tag = 'internal scratch']
  %s0 = inlined_call_operand.hbm [shape: bf16[8,256,128], index: 0, kind: input, shape index: {}]
  %s1 = inlined_call_operand.vmem [shape: bf16[128,128], index: 1, kind: input, shape index: {}]
  %s2 = inlined_call_operand.vmem [shape: f32[1,128], index: 2, kind: input, shape index: {}]
  %s3 = inlined_call_operand.vmem [shape: f32[128,4], index: 3, kind: input, shape index: {}]
  %s4 = inlined_call_operand.vmem [shape: f32[1,4], index: 4, kind: input, shape index: {}]
  %s5 = inlined_call_operand.vmem [shape: f32[4,16], index: 5, kind: input, shape index: {}]
  %s6 = inlined_call_operand.vmem [shape: f32[1,16], index: 6, kind: input, shape index: {}]
  %s7 = inlined_call_operand.vmem [shape: f32[16,4], index: 7, kind: input, shape index: {}]
  %s8 = inlined_call_operand.vmem [shape: f32[1,4], index: 8, kind: input, shape index: {}]
  %s9 = inlined_call_operand.vmem [shape: f32[8,4], index: 9, kind: output, shape index: {}]
  %s10 = sld [smem:[#allocation0]]
  $region50: #{tpu_custom_call.1} parent=0
    _
  %s12 = ssub.s32 1, %s10
  %s13 = scalar_select 0, %s12, %s10
  $region1: #{tpu_custom_call.1} parent=0
    #allocation2 [shape = 'u8[524288]{0}', space=vmem, size = 0x80000, scoped, tag = 'input window, operand 0, single buffered']
    #allocation3 [shape = 's32[1]{0}', space=sflag, size = 0x4, scoped, tag = 'scoped memory for tpu_custom_call.1']
    %14 = vsyncpa [#allocation3], 0
    // Predicated region
    $region2: #{tpu_custom_call.1} parent=1 // pred_check
      _
    $region3: #{tpu_custom_call.1} parent=1 // pred_check_branch
      %16 = sbr.rel (0) target = $region5
    $region4: #{tpu_custom_call.1} parent=1 // pred_region
      %s18 = ssub.s32 16384, 16384
      %19 = vsyncadd [#allocation3], %s18
      %s20 = sshll.u32 [#allocation2], 4
      %s21 = int_to_ptr.vmem [resolvable:$true] %s20
      %26 = dma.hbm_to_vmem [thread:$0]  %s0, 16384, %s21, [#allocation3], 64, 64, 4
    $region5: #{tpu_custom_call.1} parent=1 // pred_fallthru
      _
    // Predicated region
    $region6: #{tpu_custom_call.1} parent=1 // pred_check
      _
    $region7: #{tpu_custom_call.1} parent=1 // pred_check_branch
      %28 = sbr.rel (0) target = $region9
    $region8: #{tpu_custom_call.1} parent=1 // pred_region
      _
    $region9: #{tpu_custom_call.1} parent=1 // pred_fallthru
      _
    // Predicated region
    $region10: #{tpu_custom_call.1} parent=1 // pred_check
      _
    $region11: #{tpu_custom_call.1} parent=1 // pred_check_branch
      %30 = sbr.rel (0) target = $region13
    $region12: #{tpu_custom_call.1} parent=1 // pred_region
      _
    $region13: #{tpu_custom_call.1} parent=1 // pred_fallthru
      _
    // Predicated region
    $region14: #{tpu_custom_call.1} parent=1 // pred_check
      _
    $region15: #{tpu_custom_call.1} parent=1 // pred_check_branch
      %32 = sbr.rel (0) target = $region17
    $region16: #{tpu_custom_call.1} parent=1 // pred_region
      _
    $region17: #{tpu_custom_call.1} parent=1 // pred_fallthru
      _
    // Predicated region
    $region18: #{tpu_custom_call.1} parent=1 // pred_check
      _
    $region19: #{tpu_custom_call.1} parent=1 // pred_check_branch
      %34 = sbr.rel (0) target = $region21
    $region20: #{tpu_custom_call.1} parent=1 // pred_region
      _
    $region21: #{tpu_custom_call.1} parent=1 // pred_fallthru
      _
    // Predicated region
    $region22: #{tpu_custom_call.1} parent=1 // pred_check
      _
    $region23: #{tpu_custom_call.1} parent=1 // pred_check_branch
      %36 = sbr.rel (0) target = $region25
    $region24: #{tpu_custom_call.1} parent=1 // pred_region
      _
    $region25: #{tpu_custom_call.1} parent=1 // pred_fallthru
      _
    // Predicated region
    $region26: #{tpu_custom_call.1} parent=1 // pred_check
      _
    $region27: #{tpu_custom_call.1} parent=1 // pred_check_branch
      %38 = sbr.rel (0) target = $region29
    $region28: #{tpu_custom_call.1} parent=1 // pred_region
      _
    $region29: #{tpu_custom_call.1} parent=1 // pred_fallthru
      _
    // Predicated region
    $region30: #{tpu_custom_call.1} parent=1 // pred_check
      _
    $region31: #{tpu_custom_call.1} parent=1 // pred_check_branch
      %40 = sbr.rel (0) target = $region33
    $region32: #{tpu_custom_call.1} parent=1 // pred_region
      _
    $region33: #{tpu_custom_call.1} parent=1 // pred_fallthru
      _
    // Predicated region
    $region34: #{tpu_custom_call.1} parent=1 // pred_check
      _
    $region35: #{tpu_custom_call.1} parent=1 // pred_check_branch
      %42 = sbr.rel (0) target = $region37
    $region36: #{tpu_custom_call.1} parent=1 // pred_region
      _
    $region37: #{tpu_custom_call.1} parent=1 // pred_fallthru
      _
    // Predicated region
    $region38: #{tpu_custom_call.1} parent=1 // pred_check
      _
    $region39: #{tpu_custom_call.1} parent=1 // pred_check_branch
      %44 = sbr.rel (0) target = $region41
    $region40: #{tpu_custom_call.1} parent=1 // pred_region
      %45 = dma.done [#allocation3], 16384
    $region41: #{tpu_custom_call.1} parent=1 // pred_fallthru
      _
    %v47 = vld [vmem:[#allocation2] sm:$0xf]
    %v48 = vld [vmem:[#allocation2 + $0x4] sm:$0xf]
    %v49 = vld [vmem:[#allocation2 + $0x8] sm:$0xf]
    %v50 = vld [vmem:[#allocation2 + $0xc] sm:$0xf]
    %v51 = vld [vmem:[#allocation2 + $0x10] sm:$0xf]
    %v52 = vld [vmem:[#allocation2 + $0x14] sm:$0xf]
    %v53 = vld [vmem:[#allocation2 + $0x18] sm:$0xf]
    %v54 = vld [vmem:[#allocation2 + $0x1c] sm:$0xf]
    %v55 = vld [vmem:[#allocation2 + $0x20] sm:$0xf]
    %v56 = vld [vmem:[#allocation2 + $0x24] sm:$0xf]
    %v57 = vld [vmem:[#allocation2 + $0x28] sm:$0xf]
    %v58 = vld [vmem:[#allocation2 + $0x2c] sm:$0xf]
    %v59 = vld [vmem:[#allocation2 + $0x30] sm:$0xf]
    %v60 = vld [vmem:[#allocation2 + $0x34] sm:$0xf]
    %v61 = vld [vmem:[#allocation2 + $0x38] sm:$0xf]
    %v62 = vld [vmem:[#allocation2 + $0x3c] sm:$0xf]
    %v63 = vld [vmem:[#allocation2 + $0x40] sm:$0xf]
    %v64 = vld [vmem:[#allocation2 + $0x44] sm:$0xf]
    %v65 = vld [vmem:[#allocation2 + $0x48] sm:$0xf]
    %v66 = vld [vmem:[#allocation2 + $0x4c] sm:$0xf]
    %v67 = vld [vmem:[#allocation2 + $0x50] sm:$0xf]
    %v68 = vld [vmem:[#allocation2 + $0x54] sm:$0xf]
    %v69 = vld [vmem:[#allocation2 + $0x58] sm:$0xf]
    %v70 = vld [vmem:[#allocation2 + $0x5c] sm:$0xf]
    %v71 = vld [vmem:[#allocation2 + $0x60] sm:$0xf]
    %v72 = vld [vmem:[#allocation2 + $0x64] sm:$0xf]
    %v73 = vld [vmem:[#allocation2 + $0x68] sm:$0xf]
    %v74 = vld [vmem:[#allocation2 + $0x6c] sm:$0xf]
    %v75 = vld [vmem:[#allocation2 + $0x70] sm:$0xf]
    %v76 = vld [vmem:[#allocation2 + $0x74] sm:$0xf]
    %v77 = vld [vmem:[#allocation2 + $0x78] sm:$0xf]
    %v78 = vld [vmem:[#allocation2 + $0x7c] sm:$0xf]
    %v79 = vld [vmem:[#allocation2 + $0x80] sm:$0xf]
    %v80 = vld [vmem:[#allocation2 + $0x84] sm:$0xf]
    %v81 = vld [vmem:[#allocation2 + $0x88] sm:$0xf]
    %v82 = vld [vmem:[#allocation2 + $0x8c] sm:$0xf]
    %v83 = vld [vmem:[#allocation2 + $0x90] sm:$0xf]
    %v84 = vld [vmem:[#allocation2 + $0x94] sm:$0xf]
    %v85 = vld [vmem:[#allocation2 + $0x98] sm:$0xf]
    %v86 = vld [vmem:[#allocation2 + $0x9c] sm:$0xf]
    %v87 = vld [vmem:[#allocation2 + $0xa0] sm:$0xf]
    %v88 = vld [vmem:[#allocation2 + $0xa4] sm:$0xf]
    %v89 = vld [vmem:[#allocation2 + $0xa8] sm:$0xf]
    %v90 = vld [vmem:[#allocation2 + $0xac] sm:$0xf]
    %v91 = vld [vmem:[#allocation2 + $0xb0] sm:$0xf]
    %v92 = vld [vmem:[#allocation2 + $0xb4] sm:$0xf]
    %v93 = vld [vmem:[#allocation2 + $0xb8] sm:$0xf]
    %v94 = vld [vmem:[#allocation2 + $0xbc] sm:$0xf]
    %v95 = vld [vmem:[#allocation2 + $0xc0] sm:$0xf]
    %v96 = vld [vmem:[#allocation2 + $0xc4] sm:$0xf]
    %v97 = vld [vmem:[#allocation2 + $0xc8] sm:$0xf]
    %v98 = vld [vmem:[#allocation2 + $0xcc] sm:$0xf]
    %v99 = vld [vmem:[#allocation2 + $0xd0] sm:$0xf]
    %v100 = vld [vmem:[#allocation2 + $0xd4] sm:$0xf]
    %v101 = vld [vmem:[#allocation2 + $0xd8] sm:$0xf]
    %v102 = vld [vmem:[#allocation2 + $0xdc] sm:$0xf]
    %v103 = vld [vmem:[#allocation2 + $0xe0] sm:$0xf]
    %v104 = vld [vmem:[#allocation2 + $0xe4] sm:$0xf]
    %v105 = vld [vmem:[#allocation2 + $0xe8] sm:$0xf]
    %v106 = vld [vmem:[#allocation2 + $0xec] sm:$0xf]
    %v107 = vld [vmem:[#allocation2 + $0xf0] sm:$0xf]
    %v108 = vld [vmem:[#allocation2 + $0xf4] sm:$0xf]
    %v109 = vld [vmem:[#allocation2 + $0xf8] sm:$0xf]
    %v110 = vld [vmem:[#allocation2 + $0xfc] sm:$0xf]
    %v111 = vld [vmem:[#allocation2 + $0x100] sm:$0xf]
    %v112 = vld [vmem:[#allocation2 + $0x104] sm:$0xf]
    %v113 = vld [vmem:[#allocation2 + $0x108] sm:$0xf]
    %v114 = vld [vmem:[#allocation2 + $0x10c] sm:$0xf]
    %v115 = vld [vmem:[#allocation2 + $0x110] sm:$0xf]
    %v116 = vld [vmem:[#allocation2 + $0x114] sm:$0xf]
    %v117 = vld [vmem:[#allocation2 + $0x118] sm:$0xf]
    %v118 = vld [vmem:[#allocation2 + $0x11c] sm:$0xf]
    %v119 = vld [vmem:[#allocation2 + $0x120] sm:$0xf]
    %v120 = vld [vmem:[#allocation2 + $0x124] sm:$0xf]
    %v121 = vld [vmem:[#allocation2 + $0x128] sm:$0xf]
    %v122 = vld [vmem:[#allocation2 + $0x12c] sm:$0xf]
    %v123 = vld [vmem:[#allocation2 + $0x130] sm:$0xf]
    %v124 = vld [vmem:[#allocation2 + $0x134] sm:$0xf]
    %v125 = vld [vmem:[#allocation2 + $0x138] sm:$0xf]
    %v126 = vld [vmem:[#allocation2 + $0x13c] sm:$0xf]
    %v127 = vld [vmem:[#allocation2 + $0x140] sm:$0xf]
    %v128 = vld [vmem:[#allocation2 + $0x144] sm:$0xf]
    %v129 = vld [vmem:[#allocation2 + $0x148] sm:$0xf]
    %v130 = vld [vmem:[#allocation2 + $0x14c] sm:$0xf]
    %v131 = vld [vmem:[#allocation2 + $0x150] sm:$0xf]
    %v132 = vld [vmem:[#allocation2 + $0x154] sm:$0xf]
    %v133 = vld [vmem:[#allocation2 + $0x158] sm:$0xf]
    %v134 = vld [vmem:[#allocation2 + $0x15c] sm:$0xf]
    %v135 = vld [vmem:[#allocation2 + $0x160] sm:$0xf]
    %v136 = vld [vmem:[#allocation2 + $0x164] sm:$0xf]
    %v137 = vld [vmem:[#allocation2 + $0x168] sm:$0xf]
    %v138 = vld [vmem:[#allocation2 + $0x16c] sm:$0xf]
    %v139 = vld [vmem:[#allocation2 + $0x170] sm:$0xf]
    %v140 = vld [vmem:[#allocation2 + $0x174] sm:$0xf]
    %v141 = vld [vmem:[#allocation2 + $0x178] sm:$0xf]
    %v142 = vld [vmem:[#allocation2 + $0x17c] sm:$0xf]
    %v143 = vld [vmem:[#allocation2 + $0x180] sm:$0xf]
    %v144 = vld [vmem:[#allocation2 + $0x184] sm:$0xf]
    %v145 = vld [vmem:[#allocation2 + $0x188] sm:$0xf]
    %v146 = vld [vmem:[#allocation2 + $0x18c] sm:$0xf]
    %v147 = vld [vmem:[#allocation2 + $0x190] sm:$0xf]
    %v148 = vld [vmem:[#allocation2 + $0x194] sm:$0xf]
    %v149 = vld [vmem:[#allocation2 + $0x198] sm:$0xf]
    %v150 = vld [vmem:[#allocation2 + $0x19c] sm:$0xf]
    %v151 = vld [vmem:[#allocation2 + $0x1a0] sm:$0xf]
    %v152 = vld [vmem:[#allocation2 + $0x1a4] sm:$0xf]
    %v153 = vld [vmem:[#allocation2 + $0x1a8] sm:$0xf]
    %v154 = vld [vmem:[#allocation2 + $0x1ac] sm:$0xf]
    %v155 = vld [vmem:[#allocation2 + $0x1b0] sm:$0xf]
    %v156 = vld [vmem:[#allocation2 + $0x1b4] sm:$0xf]
    %v157 = vld [vmem:[#allocation2 + $0x1b8] sm:$0xf]
    %v158 = vld [vmem:[#allocation2 + $0x1bc] sm:$0xf]
    %v159 = vld [vmem:[#allocation2 + $0x1c0] sm:$0xf]
    %v160 = vld [vmem:[#allocation2 + $0x1c4] sm:$0xf]
    %v161 = vld [vmem:[#allocation2 + $0x1c8] sm:$0xf]
    %v162 = vld [vmem:[#allocation2 + $0x1cc] sm:$0xf]
    %v163 = vld [vmem:[#allocation2 + $0x1d0] sm:$0xf]
    %v164 = vld [vmem:[#allocation2 + $0x1d4] sm:$0xf]
    %v165 = vld [vmem:[#allocation2 + $0x1d8] sm:$0xf]
    %v166 = vld [vmem:[#allocation2 + $0x1dc] sm:$0xf]
    %v167 = vld [vmem:[#allocation2 + $0x1e0] sm:$0xf]
    %v168 = vld [vmem:[#allocation2 + $0x1e4] sm:$0xf]
    %v169 = vld [vmem:[#allocation2 + $0x1e8] sm:$0xf]
    %v170 = vld [vmem:[#allocation2 + $0x1ec] sm:$0xf]
    %v171 = vld [vmem:[#allocation2 + $0x1f0] sm:$0xf]
    %v172 = vld [vmem:[#allocation2 + $0x1f4] sm:$0xf]
    %v173 = vld [vmem:[#allocation2 + $0x1f8] sm:$0xf]
    %v174 = vld [vmem:[#allocation2 + $0x1fc] sm:$0xf]
    %v175 = vld [vmem:[#allocation2 + $0x200] sm:$0xf]
    %v176 = vld [vmem:[#allocation2 + $0x204] sm:$0xf]
    %v177 = vld [vmem:[#allocation2 + $0x208] sm:$0xf]
    %v178 = vld [vmem:[#allocation2 + $0x20c] sm:$0xf]
    %v179 = vld [vmem:[#allocation2 + $0x210] sm:$0xf]
    %v180 = vld [vmem:[#allocation2 + $0x214] sm:$0xf]
    %v181 = vld [vmem:[#allocation2 + $0x218] sm:$0xf]
    %v182 = vld [vmem:[#allocation2 + $0x21c] sm:$0xf]
    %v183 = vld [vmem:[#allocation2 + $0x220] sm:$0xf]
    %v184 = vld [vmem:[#allocation2 + $0x224] sm:$0xf]
    %v185 = vld [vmem:[#allocation2 + $0x228] sm:$0xf]
    %v186 = vld [vmem:[#allocation2 + $0x22c] sm:$0xf]
    %v187 = vld [vmem:[#allocation2 + $0x230] sm:$0xf]
    %v188 = vld [vmem:[#allocation2 + $0x234] sm:$0xf]
    %v189 = vld [vmem:[#allocation2 + $0x238] sm:$0xf]
    %v190 = vld [vmem:[#allocation2 + $0x23c] sm:$0xf]
    %v191 = vld [vmem:[#allocation2 + $0x240] sm:$0xf]
    %v192 = vld [vmem:[#allocation2 + $0x244] sm:$0xf]
    %v193 = vld [vmem:[#allocation2 + $0x248] sm:$0xf]
    %v194 = vld [vmem:[#allocation2 + $0x24c] sm:$0xf]
    %v195 = vld [vmem:[#allocation2 + $0x250] sm:$0xf]
    %v196 = vld [vmem:[#allocation2 + $0x254] sm:$0xf]
    %v197 = vld [vmem:[#allocation2 + $0x258] sm:$0xf]
    %v198 = vld [vmem:[#allocation2 + $0x25c] sm:$0xf]
    %v199 = vld [vmem:[#allocation2 + $0x260] sm:$0xf]
    %v200 = vld [vmem:[#allocation2 + $0x264] sm:$0xf]
    %v201 = vld [vmem:[#allocation2 + $0x268] sm:$0xf]
    %v202 = vld [vmem:[#allocation2 + $0x26c] sm:$0xf]
    %v203 = vld [vmem:[#allocation2 + $0x270] sm:$0xf]
    %v204 = vld [vmem:[#allocation2 + $0x274] sm:$0xf]
    %v205 = vld [vmem:[#allocation2 + $0x278] sm:$0xf]
    %v206 = vld [vmem:[#allocation2 + $0x27c] sm:$0xf]
    %v207 = vld [vmem:[#allocation2 + $0x280] sm:$0xf]
    %v208 = vld [vmem:[#allocation2 + $0x284] sm:$0xf]
    %v209 = vld [vmem:[#allocation2 + $0x288] sm:$0xf]
    %v210 = vld [vmem:[#allocation2 + $0x28c] sm:$0xf]
    %v211 = vld [vmem:[#allocation2 + $0x290] sm:$0xf]
    %v212 = vld [vmem:[#allocation2 + $0x294] sm:$0xf]
    %v213 = vld [vmem:[#allocation2 + $0x298] sm:$0xf]
    %v214 = vld [vmem:[#allocation2 + $0x29c] sm:$0xf]
    %v215 = vld [vmem:[#allocation2 + $0x2a0] sm:$0xf]
    %v216 = vld [vmem:[#allocation2 + $0x2a4] sm:$0xf]
    %v217 = vld [vmem:[#allocation2 + $0x2a8] sm:$0xf]
    %v218 = vld [vmem:[#allocation2 + $0x2ac] sm:$0xf]
    %v219 = vld [vmem:[#allocation2 + $0x2b0] sm:$0xf]
    %v220 = vld [vmem:[#allocation2 + $0x2b4] sm:$0xf]
    %v221 = vld [vmem:[#allocation2 + $0x2b8] sm:$0xf]
    %v222 = vld [vmem:[#allocation2 + $0x2bc] sm:$0xf]
    %v223 = vld [vmem:[#allocation2 + $0x2c0] sm:$0xf]
    %v224 = vld [vmem:[#allocation2 + $0x2c4] sm:$0xf]
    %v225 = vld [vmem:[#allocation2 + $0x2c8] sm:$0xf]
    %v226 = vld [vmem:[#allocation2 + $0x2cc] sm:$0xf]
    %v227 = vld [vmem:[#allocation2 + $0x2d0] sm:$0xf]
    %v228 = vld [vmem:[#allocation2 + $0x2d4] sm:$0xf]
    %v229 = vld [vmem:[#allocation2 + $0x2d8] sm:$0xf]
    %v230 = vld [vmem:[#allocation2 + $0x2dc] sm:$0xf]
    %v231 = vld [vmem:[#allocation2 + $0x2e0] sm:$0xf]
    %v232 = vld [vmem:[#allocation2 + $0x2e4] sm:$0xf]
    %v233 = vld [vmem:[#allocation2 + $0x2e8] sm:$0xf]
    %v234 = vld [vmem:[#allocation2 + $0x2ec] sm:$0xf]
    %v235 = vld [vmem:[#allocation2 + $0x2f0] sm:$0xf]
    %v236 = vld [vmem:[#allocation2 + $0x2f4] sm:$0xf]
    %v237 = vld [vmem:[#allocation2 + $0x2f8] sm:$0xf]
    %v238 = vld [vmem:[#allocation2 + $0x2fc] sm:$0xf]
    %v239 = vld [vmem:[#allocation2 + $0x300] sm:$0xf]
    %v240 = vld [vmem:[#allocation2 + $0x304] sm:$0xf]
    %v241 = vld [vmem:[#allocation2 + $0x308] sm:$0xf]
    %v242 = vld [vmem:[#allocation2 + $0x30c] sm:$0xf]
    %v243 = vld [vmem:[#allocation2 + $0x310] sm:$0xf]
    %v244 = vld [vmem:[#allocation2 + $0x314] sm:$0xf]
    %v245 = vld [vmem:[#allocation2 + $0x318] sm:$0xf]
    %v246 = vld [vmem:[#allocation2 + $0x31c] sm:$0xf]
    %v247 = vld [vmem:[#allocation2 + $0x320] sm:$0xf]
    %v248 = vld [vmem:[#allocation2 + $0x324] sm:$0xf]
    %v249 = vld [vmem:[#allocation2 + $0x328] sm:$0xf]
    %v250 = vld [vmem:[#allocation2 + $0x32c] sm:$0xf]
    %v251 = vld [vmem:[#allocation2 + $0x330] sm:$0xf]
    %v252 = vld [vmem:[#allocation2 + $0x334] sm:$0xf]
    %v253 = vld [vmem:[#allocation2 + $0x338] sm:$0xf]
    %v254 = vld [vmem:[#allocation2 + $0x33c] sm:$0xf]
    %v255 = vld [vmem:[#allocation2 + $0x340] sm:$0xf]
    %v256 = vld [vmem:[#allocation2 + $0x344] sm:$0xf]
    %v257 = vld [vmem:[#allocation2 + $0x348] sm:$0xf]
    %v258 = vld [vmem:[#allocation2 + $0x34c] sm:$0xf]
    %v259 = vld [vmem:[#allocation2 + $0x350] sm:$0xf]
    %v260 = vld [vmem:[#allocation2 + $0x354] sm:$0xf]
    %v261 = vld [vmem:[#allocation2 + $0x358] sm:$0xf]
    %v262 = vld [vmem:[#allocation2 + $0x35c] sm:$0xf]
    %v263 = vld [vmem:[#allocation2 + $0x360] sm:$0xf]
    %v264 = vld [vmem:[#allocation2 + $0x364] sm:$0xf]
    %v265 = vld [vmem:[#allocation2 + $0x368] sm:$0xf]
    %v266 = vld [vmem:[#allocation2 + $0x36c] sm:$0xf]
    %v267 = vld [vmem:[#allocation2 + $0x370] sm:$0xf]
    %v268 = vld [vmem:[#allocation2 + $0x374] sm:$0xf]
    %v269 = vld [vmem:[#allocation2 + $0x378] sm:$0xf]
    %v270 = vld [vmem:[#allocation2 + $0x37c] sm:$0xf]
    %v271 = vld [vmem:[#allocation2 + $0x380] sm:$0xf]
    %v272 = vld [vmem:[#allocation2 + $0x384] sm:$0xf]
    %v273 = vld [vmem:[#allocation2 + $0x388] sm:$0xf]
    %v274 = vld [vmem:[#allocation2 + $0x38c] sm:$0xf]
    %v275 = vld [vmem:[#allocation2 + $0x390] sm:$0xf]
    %v276 = vld [vmem:[#allocation2 + $0x394] sm:$0xf]
    %v277 = vld [vmem:[#allocation2 + $0x398] sm:$0xf]
    %v278 = vld [vmem:[#allocation2 + $0x39c] sm:$0xf]
    %v279 = vld [vmem:[#allocation2 + $0x3a0] sm:$0xf]
    %v280 = vld [vmem:[#allocation2 + $0x3a4] sm:$0xf]
    %v281 = vld [vmem:[#allocation2 + $0x3a8] sm:$0xf]
    %v282 = vld [vmem:[#allocation2 + $0x3ac] sm:$0xf]
    %v283 = vld [vmem:[#allocation2 + $0x3b0] sm:$0xf]
    %v284 = vld [vmem:[#allocation2 + $0x3b4] sm:$0xf]
    %v285 = vld [vmem:[#allocation2 + $0x3b8] sm:$0xf]
    %v286 = vld [vmem:[#allocation2 + $0x3bc] sm:$0xf]
    %v287 = vld [vmem:[#allocation2 + $0x3c0] sm:$0xf]
    %v288 = vld [vmem:[#allocation2 + $0x3c4] sm:$0xf]
    %v289 = vld [vmem:[#allocation2 + $0x3c8] sm:$0xf]
    %v290 = vld [vmem:[#allocation2 + $0x3cc] sm:$0xf]
    %v291 = vld [vmem:[#allocation2 + $0x3d0] sm:$0xf]
    %v292 = vld [vmem:[#allocation2 + $0x3d4] sm:$0xf]
    %v293 = vld [vmem:[#allocation2 + $0x3d8] sm:$0xf]
    %v294 = vld [vmem:[#allocation2 + $0x3dc] sm:$0xf]
    %v295 = vld [vmem:[#allocation2 + $0x3e0] sm:$0xf]
    %v296 = vld [vmem:[#allocation2 + $0x3e4] sm:$0xf]
    %v297 = vld [vmem:[#allocation2 + $0x3e8] sm:$0xf]
    %v298 = vld [vmem:[#allocation2 + $0x3ec] sm:$0xf]
    %v299 = vld [vmem:[#allocation2 + $0x3f0] sm:$0xf]
    %v300 = vld [vmem:[#allocation2 + $0x3f4] sm:$0xf]
    %v301 = vld [vmem:[#allocation2 + $0x3f8] sm:$0xf]
    %v302 = vld [vmem:[#allocation2 + $0x3fc] sm:$0xf]
    %v303 = vld [vmem:[%s1] sm:$0xf]
    %v304 = vld [vmem:[%s1 + $0x4] sm:$0xf]
    %v305 = vld [vmem:[%s1 + $0x8] sm:$0xf]
    %v306 = vld [vmem:[%s1 + $0xc] sm:$0xf]
    %v307 = vld [vmem:[%s1 + $0x10] sm:$0xf]
    %v308 = vld [vmem:[%s1 + $0x14] sm:$0xf]
    %v309 = vld [vmem:[%s1 + $0x18] sm:$0xf]
    %v310 = vld [vmem:[%s1 + $0x1c] sm:$0xf]
    %v311 = vld [vmem:[%s1 + $0x20] sm:$0xf]
    %v312 = vld [vmem:[%s1 + $0x24] sm:$0xf]
    %v313 = vld [vmem:[%s1 + $0x28] sm:$0xf]
    %v314 = vld [vmem:[%s1 + $0x2c] sm:$0xf]
    %v315 = vld [vmem:[%s1 + $0x30] sm:$0xf]
    %v316 = vld [vmem:[%s1 + $0x34] sm:$0xf]
    %v317 = vld [vmem:[%s1 + $0x38] sm:$0xf]
    %v318 = vld [vmem:[%s1 + $0x3c] sm:$0xf]
    %v319 = vld [vmem:[%s2] sm:$0x1]
    %v321 = vlaneseq
    %v322 = vshrl.u32 %v321, 7
    %v323 = vsub.s32 0, %v322
    %v324 = vrot.slane %v319, %v323
    %v582 = vunpack.c.l.b16 %v47
    %v583 = vunpack.c.l.b16 %v48
    %v584 = vunpack.c.l.b16 %v49
    %v585 = vunpack.c.l.b16 %v50
    %v586 = vunpack.c.l.b16 %v51
    %v587 = vunpack.c.l.b16 %v52
    %v588 = vunpack.c.l.b16 %v53
    %v589 = vunpack.c.l.b16 %v54
    %v590 = vunpack.c.l.b16 %v55
    %v591 = vunpack.c.l.b16 %v56
    %v592 = vunpack.c.l.b16 %v57
    %v593 = vunpack.c.l.b16 %v58
    %v594 = vunpack.c.l.b16 %v59
    %v595 = vunpack.c.l.b16 %v60
    %v596 = vunpack.c.l.b16 %v61
    %v597 = vunpack.c.l.b16 %v62
    %v598 = vunpack.c.l.b16 %v63
    %v599 = vunpack.c.l.b16 %v64
    %v600 = vunpack.c.l.b16 %v65
    %v601 = vunpack.c.l.b16 %v66
    %v602 = vunpack.c.l.b16 %v67
    %v603 = vunpack.c.l.b16 %v68
    %v604 = vunpack.c.l.b16 %v69
    %v605 = vunpack.c.l.b16 %v70
    %v606 = vunpack.c.l.b16 %v71
    %v607 = vunpack.c.l.b16 %v72
    %v608 = vunpack.c.l.b16 %v73
    %v609 = vunpack.c.l.b16 %v74
    %v610 = vunpack.c.l.b16 %v75
    %v611 = vunpack.c.l.b16 %v76
    %v612 = vunpack.c.l.b16 %v77
    %v613 = vunpack.c.l.b16 %v78
    %v614 = vunpack.c.l.b16 %v79
    %v615 = vunpack.c.l.b16 %v80
    %v616 = vunpack.c.l.b16 %v81
    %v617 = vunpack.c.l.b16 %v82
    %v618 = vunpack.c.l.b16 %v83
    %v619 = vunpack.c.l.b16 %v84
    %v620 = vunpack.c.l.b16 %v85
    %v621 = vunpack.c.l.b16 %v86
    %v622 = vunpack.c.l.b16 %v87
    %v623 = vunpack.c.l.b16 %v88
    %v624 = vunpack.c.l.b16 %v89
    %v625 = vunpack.c.l.b16 %v90
    %v626 = vunpack.c.l.b16 %v91
    %v627 = vunpack.c.l.b16 %v92
    %v628 = vunpack.c.l.b16 %v93
    %v629 = vunpack.c.l.b16 %v94
    %v630 = vunpack.c.l.b16 %v95
    %v631 = vunpack.c.l.b16 %v96
    %v632 = vunpack.c.l.b16 %v97
    %v633 = vunpack.c.l.b16 %v98
    %v634 = vunpack.c.l.b16 %v99
    %v635 = vunpack.c.l.b16 %v100
    %v636 = vunpack.c.l.b16 %v101
    %v637 = vunpack.c.l.b16 %v102
    %v638 = vunpack.c.l.b16 %v103
    %v639 = vunpack.c.l.b16 %v104
    %v640 = vunpack.c.l.b16 %v105
    %v641 = vunpack.c.l.b16 %v106
    %v642 = vunpack.c.l.b16 %v107
    %v643 = vunpack.c.l.b16 %v108
    %v644 = vunpack.c.l.b16 %v109
    %v645 = vunpack.c.l.b16 %v110
    %v646 = vunpack.c.l.b16 %v111
    %v647 = vunpack.c.l.b16 %v112
    %v648 = vunpack.c.l.b16 %v113
    %v649 = vunpack.c.l.b16 %v114
    %v650 = vunpack.c.l.b16 %v115
    %v651 = vunpack.c.l.b16 %v116
    %v652 = vunpack.c.l.b16 %v117
    %v653 = vunpack.c.l.b16 %v118
    %v654 = vunpack.c.l.b16 %v119
    %v655 = vunpack.c.l.b16 %v120
    %v656 = vunpack.c.l.b16 %v121
    %v657 = vunpack.c.l.b16 %v122
    %v658 = vunpack.c.l.b16 %v123
    %v659 = vunpack.c.l.b16 %v124
    %v660 = vunpack.c.l.b16 %v125
    %v661 = vunpack.c.l.b16 %v126
    %v662 = vunpack.c.l.b16 %v127
    %v663 = vunpack.c.l.b16 %v128
    %v664 = vunpack.c.l.b16 %v129
    %v665 = vunpack.c.l.b16 %v130
    %v666 = vunpack.c.l.b16 %v131
    %v667 = vunpack.c.l.b16 %v132
    %v668 = vunpack.c.l.b16 %v133
    %v669 = vunpack.c.l.b16 %v134
    %v670 = vunpack.c.l.b16 %v135
    %v671 = vunpack.c.l.b16 %v136
    %v672 = vunpack.c.l.b16 %v137
    %v673 = vunpack.c.l.b16 %v138
    %v674 = vunpack.c.l.b16 %v139
    %v675 = vunpack.c.l.b16 %v140
    %v676 = vunpack.c.l.b16 %v141
    %v677 = vunpack.c.l.b16 %v142
    %v678 = vunpack.c.l.b16 %v143
    %v679 = vunpack.c.l.b16 %v144
    %v680 = vunpack.c.l.b16 %v145
    %v681 = vunpack.c.l.b16 %v146
    %v682 = vunpack.c.l.b16 %v147
    %v683 = vunpack.c.l.b16 %v148
    %v684 = vunpack.c.l.b16 %v149
    %v685 = vunpack.c.l.b16 %v150
    %v686 = vunpack.c.l.b16 %v151
    %v687 = vunpack.c.l.b16 %v152
    %v688 = vunpack.c.l.b16 %v153
    %v689 = vunpack.c.l.b16 %v154
    %v690 = vunpack.c.l.b16 %v155
    %v691 = vunpack.c.l.b16 %v156
    %v692 = vunpack.c.l.b16 %v157
    %v693 = vunpack.c.l.b16 %v158
    %v694 = vunpack.c.l.b16 %v159
    %v695 = vunpack.c.l.b16 %v160
    %v696 = vunpack.c.l.b16 %v161
    %v697 = vunpack.c.l.b16 %v162
    %v698 = vunpack.c.l.b16 %v163
    %v699 = vunpack.c.l.b16 %v164
    %v700 = vunpack.c.l.b16 %v165
    %v701 = vunpack.c.l.b16 %v166
    %v702 = vunpack.c.l.b16 %v167
    %v703 = vunpack.c.l.b16 %v168
    %v704 = vunpack.c.l.b16 %v169
    %v705 = vunpack.c.l.b16 %v170
    %v706 = vunpack.c.l.b16 %v171
    %v707 = vunpack.c.l.b16 %v172
    %v708 = vunpack.c.l.b16 %v173
    %v709 = vunpack.c.l.b16 %v174
    %v710 = vunpack.c.l.b16 %v175
    %v711 = vunpack.c.l.b16 %v176
    %v712 = vunpack.c.l.b16 %v177
    %v713 = vunpack.c.l.b16 %v178
    %v714 = vunpack.c.l.b16 %v179
    %v715 = vunpack.c.l.b16 %v180
    %v716 = vunpack.c.l.b16 %v181
    %v717 = vunpack.c.l.b16 %v182
    %v718 = vunpack.c.l.b16 %v183
    %v719 = vunpack.c.l.b16 %v184
    %v720 = vunpack.c.l.b16 %v185
    %v721 = vunpack.c.l.b16 %v186
    %v722 = vunpack.c.l.b16 %v187
    %v723 = vunpack.c.l.b16 %v188
    %v724 = vunpack.c.l.b16 %v189
    %v725 = vunpack.c.l.b16 %v190
    %v726 = vunpack.c.l.b16 %v191
    %v727 = vunpack.c.l.b16 %v192
    %v728 = vunpack.c.l.b16 %v193
    %v729 = vunpack.c.l.b16 %v194
    %v730 = vunpack.c.l.b16 %v195
    %v731 = vunpack.c.l.b16 %v196
    %v732 = vunpack.c.l.b16 %v197
    %v733 = vunpack.c.l.b16 %v198
    %v734 = vunpack.c.l.b16 %v199
    %v735 = vunpack.c.l.b16 %v200
    %v736 = vunpack.c.l.b16 %v201
    %v737 = vunpack.c.l.b16 %v202
    %v738 = vunpack.c.l.b16 %v203
    %v739 = vunpack.c.l.b16 %v204
    %v740 = vunpack.c.l.b16 %v205
    %v741 = vunpack.c.l.b16 %v206
    %v742 = vunpack.c.l.b16 %v207
    %v743 = vunpack.c.l.b16 %v208
    %v744 = vunpack.c.l.b16 %v209
    %v745 = vunpack.c.l.b16 %v210
    %v746 = vunpack.c.l.b16 %v211
    %v747 = vunpack.c.l.b16 %v212
    %v748 = vunpack.c.l.b16 %v213
    %v749 = vunpack.c.l.b16 %v214
    %v750 = vunpack.c.l.b16 %v215
    %v751 = vunpack.c.l.b16 %v216
    %v752 = vunpack.c.l.b16 %v217
    %v753 = vunpack.c.l.b16 %v218
    %v754 = vunpack.c.l.b16 %v219
    %v755 = vunpack.c.l.b16 %v220
    %v756 = vunpack.c.l.b16 %v221
    %v757 = vunpack.c.l.b16 %v222
    %v758 = vunpack.c.l.b16 %v223
    %v759 = vunpack.c.l.b16 %v224
    %v760 = vunpack.c.l.b16 %v225
    %v761 = vunpack.c.l.b16 %v226
    %v762 = vunpack.c.l.b16 %v227
    %v763 = vunpack.c.l.b16 %v228
    %v764 = vunpack.c.l.b16 %v229
    %v765 = vunpack.c.l.b16 %v230
    %v766 = vunpack.c.l.b16 %v231
    %v767 = vunpack.c.l.b16 %v232
    %v768 = vunpack.c.l.b16 %v233
    %v769 = vunpack.c.l.b16 %v234
    %v770 = vunpack.c.l.b16 %v235
    %v771 = vunpack.c.l.b16 %v236
    %v772 = vunpack.c.l.b16 %v237
    %v773 = vunpack.c.l.b16 %v238
    %v774 = vunpack.c.l.b16 %v239
    %v775 = vunpack.c.l.b16 %v240
    %v776 = vunpack.c.l.b16 %v241
    %v777 = vunpack.c.l.b16 %v242
    %v778 = vunpack.c.l.b16 %v243
    %v779 = vunpack.c.l.b16 %v244
    %v780 = vunpack.c.l.b16 %v245
    %v781 = vunpack.c.l.b16 %v246
    %v782 = vunpack.c.l.b16 %v247
    %v783 = vunpack.c.l.b16 %v248
    %v784 = vunpack.c.l.b16 %v249
    %v785 = vunpack.c.l.b16 %v250
    %v786 = vunpack.c.l.b16 %v251
    %v787 = vunpack.c.l.b16 %v252
    %v788 = vunpack.c.l.b16 %v253
    %v789 = vunpack.c.l.b16 %v254
    %v790 = vunpack.c.l.b16 %v255
    %v791 = vunpack.c.l.b16 %v256
    %v792 = vunpack.c.l.b16 %v257
    %v793 = vunpack.c.l.b16 %v258
    %v794 = vunpack.c.l.b16 %v259
    %v795 = vunpack.c.l.b16 %v260
    %v796 = vunpack.c.l.b16 %v261
    %v797 = vunpack.c.l.b16 %v262
    %v798 = vunpack.c.l.b16 %v263
    %v799 = vunpack.c.l.b16 %v264
    %v800 = vunpack.c.l.b16 %v265
    %v801 = vunpack.c.l.b16 %v266
    %v802 = vunpack.c.l.b16 %v267
    %v803 = vunpack.c.l.b16 %v268
    %v804 = vunpack.c.l.b16 %v269
    %v805 = vunpack.c.l.b16 %v270
    %v806 = vunpack.c.l.b16 %v271
    %v807 = vunpack.c.l.b16 %v272
    %v808 = vunpack.c.l.b16 %v273
    %v809 = vunpack.c.l.b16 %v274
    %v810 = vunpack.c.l.b16 %v275
    %v811 = vunpack.c.l.b16 %v276
    %v812 = vunpack.c.l.b16 %v277
    %v813 = vunpack.c.l.b16 %v278
    %v814 = vunpack.c.l.b16 %v279
    %v815 = vunpack.c.l.b16 %v280
    %v816 = vunpack.c.l.b16 %v281
    %v817 = vunpack.c.l.b16 %v282
    %v818 = vunpack.c.l.b16 %v283
    %v819 = vunpack.c.l.b16 %v284
    %v820 = vunpack.c.l.b16 %v285
    %v821 = vunpack.c.l.b16 %v286
    %v822 = vunpack.c.l.b16 %v287
    %v823 = vunpack.c.l.b16 %v288
    %v824 = vunpack.c.l.b16 %v289
    %v825 = vunpack.c.l.b16 %v290
    %v826 = vunpack.c.l.b16 %v291
    %v827 = vunpack.c.l.b16 %v292
    %v828 = vunpack.c.l.b16 %v293
    %v829 = vunpack.c.l.b16 %v294
    %v830 = vunpack.c.l.b16 %v295
    %v831 = vunpack.c.l.b16 %v296
    %v832 = vunpack.c.l.b16 %v297
    %v833 = vunpack.c.l.b16 %v298
    %v834 = vunpack.c.l.b16 %v299
    %v835 = vunpack.c.l.b16 %v300
    %v836 = vunpack.c.l.b16 %v301
    %v837 = vunpack.c.l.b16 %v302
    %v838 = vpack.c.b16 %v583, %v582
    %v839 = vpack.c.b16 %v585, %v584
    %v840 = vpack.c.b16 %v587, %v586
    %v841 = vpack.c.b16 %v589, %v588
    %v842 = vpack.c.b16 %v591, %v590
    %v843 = vpack.c.b16 %v593, %v592
    %v844 = vpack.c.b16 %v595, %v594
    %v845 = vpack.c.b16 %v597, %v596
    %v846 = vpack.c.b16 %v599, %v598
    %v847 = vpack.c.b16 %v601, %v600
    %v848 = vpack.c.b16 %v603, %v602
    %v849 = vpack.c.b16 %v605, %v604
    %v850 = vpack.c.b16 %v607, %v606
    %v851 = vpack.c.b16 %v609, %v608
    %v852 = vpack.c.b16 %v611, %v610
    %v853 = vpack.c.b16 %v613, %v612
    %v854 = vpack.c.b16 %v615, %v614
    %v855 = vpack.c.b16 %v617, %v616
    %v856 = vpack.c.b16 %v619, %v618
    %v857 = vpack.c.b16 %v621, %v620
    %v858 = vpack.c.b16 %v623, %v622
    %v859 = vpack.c.b16 %v625, %v624
    %v860 = vpack.c.b16 %v627, %v626
    %v861 = vpack.c.b16 %v629, %v628
    %v862 = vpack.c.b16 %v631, %v630
    %v863 = vpack.c.b16 %v633, %v632
    %v864 = vpack.c.b16 %v635, %v634
    %v865 = vpack.c.b16 %v637, %v636
    %v866 = vpack.c.b16 %v639, %v638
    %v867 = vpack.c.b16 %v641, %v640
    %v868 = vpack.c.b16 %v643, %v642
    %v869 = vpack.c.b16 %v645, %v644
    %v870 = vpack.c.b16 %v647, %v646
    %v871 = vpack.c.b16 %v649, %v648
    %v872 = vpack.c.b16 %v651, %v650
    %v873 = vpack.c.b16 %v653, %v652
    %v874 = vpack.c.b16 %v655, %v654
    %v875 = vpack.c.b16 %v657, %v656
    %v876 = vpack.c.b16 %v659, %v658
    %v877 = vpack.c.b16 %v661, %v660
    %v878 = vpack.c.b16 %v663, %v662
    %v879 = vpack.c.b16 %v665, %v664
    %v880 = vpack.c.b16 %v667, %v666
    %v881 = vpack.c.b16 %v669, %v668
    %v882 = vpack.c.b16 %v671, %v670
    %v883 = vpack.c.b16 %v673, %v672
    %v884 = vpack.c.b16 %v675, %v674
    %v885 = vpack.c.b16 %v677, %v676
    %v886 = vpack.c.b16 %v679, %v678
    %v887 = vpack.c.b16 %v681, %v680
    %v888 = vpack.c.b16 %v683, %v682
    %v889 = vpack.c.b16 %v685, %v684
    %v890 = vpack.c.b16 %v687, %v686
    %v891 = vpack.c.b16 %v689, %v688
    %v892 = vpack.c.b16 %v691, %v690
    %v893 = vpack.c.b16 %v693, %v692
    %v894 = vpack.c.b16 %v695, %v694
    %v895 = vpack.c.b16 %v697, %v696
    %v896 = vpack.c.b16 %v699, %v698
    %v897 = vpack.c.b16 %v701, %v700
    %v898 = vpack.c.b16 %v703, %v702
    %v899 = vpack.c.b16 %v705, %v704
    %v900 = vpack.c.b16 %v707, %v706
    %v901 = vpack.c.b16 %v709, %v708
    %v902 = vpack.c.b16 %v711, %v710
    %v903 = vpack.c.b16 %v713, %v712
    %v904 = vpack.c.b16 %v715, %v714
    %v905 = vpack.c.b16 %v717, %v716
    %v906 = vpack.c.b16 %v719, %v718
    %v907 = vpack.c.b16 %v721, %v720
    %v908 = vpack.c.b16 %v723, %v722
    %v909 = vpack.c.b16 %v725, %v724
    %v910 = vpack.c.b16 %v727, %v726
    %v911 = vpack.c.b16 %v729, %v728
    %v912 = vpack.c.b16 %v731, %v730
    %v913 = vpack.c.b16 %v733, %v732
    %v914 = vpack.c.b16 %v735, %v734
    %v915 = vpack.c.b16 %v737, %v736
    %v916 = vpack.c.b16 %v739, %v738
    %v917 = vpack.c.b16 %v741, %v740
    %v918 = vpack.c.b16 %v743, %v742
    %v919 = vpack.c.b16 %v745, %v744
    %v920 = vpack.c.b16 %v747, %v746
    %v921 = vpack.c.b16 %v749, %v748
    %v922 = vpack.c.b16 %v751, %v750
    %v923 = vpack.c.b16 %v753, %v752
    %v924 = vpack.c.b16 %v755, %v754
    %v925 = vpack.c.b16 %v757, %v756
    %v926 = vpack.c.b16 %v759, %v758
    %v927 = vpack.c.b16 %v761, %v760
    %v928 = vpack.c.b16 %v763, %v762
    %v929 = vpack.c.b16 %v765, %v764
    %v930 = vpack.c.b16 %v767, %v766
    %v931 = vpack.c.b16 %v769, %v768
    %v932 = vpack.c.b16 %v771, %v770
    %v933 = vpack.c.b16 %v773, %v772
    %v934 = vpack.c.b16 %v775, %v774
    %v935 = vpack.c.b16 %v777, %v776
    %v936 = vpack.c.b16 %v779, %v778
    %v937 = vpack.c.b16 %v781, %v780
    %v938 = vpack.c.b16 %v783, %v782
    %v939 = vpack.c.b16 %v785, %v784
    %v940 = vpack.c.b16 %v787, %v786
    %v941 = vpack.c.b16 %v789, %v788
    %v942 = vpack.c.b16 %v791, %v790
    %v943 = vpack.c.b16 %v793, %v792
    %v944 = vpack.c.b16 %v795, %v794
    %v945 = vpack.c.b16 %v797, %v796
    %v946 = vpack.c.b16 %v799, %v798
    %v947 = vpack.c.b16 %v801, %v800
    %v948 = vpack.c.b16 %v803, %v802
    %v949 = vpack.c.b16 %v805, %v804
    %v950 = vpack.c.b16 %v807, %v806
    %v951 = vpack.c.b16 %v809, %v808
    %v952 = vpack.c.b16 %v811, %v810
    %v953 = vpack.c.b16 %v813, %v812
    %v954 = vpack.c.b16 %v815, %v814
    %v955 = vpack.c.b16 %v817, %v816
    %v956 = vpack.c.b16 %v819, %v818
    %v957 = vpack.c.b16 %v821, %v820
    %v958 = vpack.c.b16 %v823, %v822
    %v959 = vpack.c.b16 %v825, %v824
    %v960 = vpack.c.b16 %v827, %v826
    %v961 = vpack.c.b16 %v829, %v828
    %v962 = vpack.c.b16 %v831, %v830
    %v963 = vpack.c.b16 %v833, %v832
    %v964 = vpack.c.b16 %v835, %v834
    %v965 = vpack.c.b16 %v837, %v836
    %v1110 = vunpack.c.l.b16 %v303
    %v1111 = vunpack.c.l.b16 %v304
    %v1112 = vunpack.c.l.b16 %v305
    %v1113 = vunpack.c.l.b16 %v306
    %v1114 = vunpack.c.l.b16 %v307
    %v1115 = vunpack.c.l.b16 %v308
    %v1116 = vunpack.c.l.b16 %v309
    %v1117 = vunpack.c.l.b16 %v310
    %v1118 = vunpack.c.l.b16 %v311
    %v1119 = vunpack.c.l.b16 %v312
    %v1120 = vunpack.c.l.b16 %v313
    %v1121 = vunpack.c.l.b16 %v314
    %v1122 = vunpack.c.l.b16 %v315
    %v1123 = vunpack.c.l.b16 %v316
    %v1124 = vunpack.c.l.b16 %v317
    %v1125 = vunpack.c.l.b16 %v318
    %v1126 = vpack.c.b16 %v1111, %v1110
    %v1127 = vpack.c.b16 %v1113, %v1112
    %v1128 = vpack.c.b16 %v1115, %v1114
    %v1129 = vpack.c.b16 %v1117, %v1116
    %v1130 = vpack.c.b16 %v1119, %v1118
    %v1131 = vpack.c.b16 %v1121, %v1120
    %v1132 = vpack.c.b16 %v1123, %v1122
    %v1133 = vpack.c.b16 %v1125, %v1124
    %1142 = vmatprep.subr.bf16.mxu0 0
    %1143 = vmatpush1.bf16.msra.mxu0 %v1126
    %1144 = vmatprep.subr.bf16.mxu0 0
    %1145 = vmatpush1.bf16.msra.mxu0 %v1127
    %1146 = vmatprep.subr.bf16.mxu0 0
    %1147 = vmatpush1.bf16.msra.mxu0 %v1128
    %1148 = vmatprep.subr.bf16.mxu0 0
    %1149 = vmatpush1.bf16.msra.mxu0 %v1129
    %1150 = vmatprep.subr.bf16.mxu0 0
    %1151 = vmatpush1.bf16.msra.mxu0 %v1130
    %1152 = vmatprep.subr.bf16.mxu0 0
    %1153 = vmatpush1.bf16.msra.mxu0 %v1131
    %1154 = vmatprep.subr.bf16.mxu0 0
    %1155 = vmatpush1.bf16.msra.mxu0 %v1132
    %1156 = vmatprep.subr.bf16.mxu0 0
    %1157 = vmatpush1.bf16.msra.mxu0 %v1133
    %1158 = vmatprep.subr.bf16.mxu0 0
    %1159 = vmatpush1.bf16.msra.mxu0 0
    %1160 = vmatprep.subr.bf16.mxu0 0
    %1161 = vmatpush1.bf16.msra.mxu0 0
    %1162 = vmatprep.subr.bf16.mxu0 0
    %1163 = vmatpush1.bf16.msra.mxu0 0
    %1164 = vmatprep.subr.bf16.mxu0 0
    %1165 = vmatpush1.bf16.msra.mxu0 0
    %1166 = vmatprep.subr.bf16.mxu0 0
    %1167 = vmatpush1.bf16.msra.mxu0 0
    %1168 = vmatprep.subr.bf16.mxu0 0
    %1169 = vmatpush1.bf16.msra.mxu0 0
    %1170 = vmatprep.subr.bf16.mxu0 0
    %1171 = vmatpush1.bf16.msra.mxu0 0
    %1172 = vmatprep.subr.bf16.mxu0 0
    %1173 = vmatpush1.bf16.msra.mxu0 0
    %1174 = vmatprep.mubr.bf16.mxu0 0
    %1175 = vmatmul.mubr.bf16.gmra.mrb[0].mxu0 %v838
    %v1176 = vpop.f32.mrb[0].mxu0
    %v1177 = vadd.f32 %v324, %v1176
    %v1178 = vpop.f32.mrb[0].mxu0
    %v1179 = vpop.f32.mrb[0].mxu0
    %v1180 = vadd.f32 %v324, %v1179
    %v1181 = vpop.f32.mrb[0].mxu0
    %1182 = vmatprep.mubr.bf16.mxu0 0
    %1183 = vmatmul.mubr.bf16.gmra.mrb[0].mxu0 %v839
    %v1184 = vpop.f32.mrb[0].mxu0
    %v1185 = vadd.f32 %v324, %v1184
    %v1186 = vpop.f32.mrb[0].mxu0
    %v1187 = vpop.f32.mrb[0].mxu0
    %v1188 = vadd.f32 %v324, %v1187
    %v1189 = vpop.f32.mrb[0].mxu0
    %1190 = vmatprep.mubr.bf16.mxu0 0
    %1191 = vmatmul.mubr.bf16.gmra.mrb[0].mxu0 %v840
    %v1192 = vpop.f32.mrb[0].mxu0
    %v1193 = vadd.f32 %v324, %v1192
    %v1194 = vpop.f32.mrb[0].mxu0
    %v1195 = vpop.f32.mrb[0].mxu0
    %v1196 = vadd.f32 %v324, %v1195
    %v1197 = vpop.f32.mrb[0].mxu0
    %1198 = vmatprep.mubr.bf16.mxu0 0
    %1199 = vmatmul.mubr.bf16.gmra.mrb[0].mxu0 %v841
    %v1200 = vpop.f32.mrb[0].mxu0
    %v1201 = vadd.f32 %v324, %v1200
    %v1202 = vpop.f32.mrb[0].mxu0
    %v1203 = vpop.f32.mrb[0].mxu0
    %v1204 = vadd.f32 %v324, %v1203
    %v1205 = vpop.f32.mrb[0].mxu0
    %1206 = vmatprep.mubr.bf16.mxu0 0
    %1207 = vmatmul.mubr.bf16.gmra.mrb[0].mxu0 %v842
    %v1208 = vpop.f32.mrb[0].mxu0
    %v1209 = vadd.f32 %v324, %v1208
    %v1210 = vpop.f32.mrb[0].mxu0
    %v1211 = vpop.f32.mrb[0].mxu0
    %v1212 = vadd.f32 %v324, %v1211
    %v1213 = vpop.f32.mrb[0].mxu0
    %1214 = vmatprep.mubr.bf16.mxu0 0
    %1215 = vmatmul.mubr.bf16.gmra.mrb[0].mxu0 %v843
    %v1216 = vpop.f32.mrb[0].mxu0
    %v1217 = vadd.f32 %v324, %v1216
    %v1218 = vpop.f32.mrb[0].mxu0
    %v1219 = vpop.f32.mrb[0].mxu0
    %v1220 = vadd.f32 %v324, %v1219
    %v1221 = vpop.f32.mrb[0].mxu0
    %1222 = vmatprep.mubr.bf16.mxu0 0
    %1223 = vmatmul.mubr.bf16.gmra.mrb[0].mxu0 %v844
    %v1224 = vpop.f32.mrb[0].mxu0
    %v1225 = vadd.f32 %v324, %v1224
    %v1226 = vpop.f32.mrb[0].mxu0
    %v1227 = vpop.f32.mrb[0].mxu0
    %v1228 = vadd.f32 %v324, %v1227
    %v1229 = vpop.f32.mrb[0].mxu0
    %1230 = vmatprep.mubr.bf16.mxu0 0
    %1231 = vmatmul.mubr.bf16.gmra.mrb[0].mxu0 %v845
    %v1232 = vpop.f32.mrb[0].mxu0
    %v1233 = vadd.f32 %v324, %v1232
    %v1234 = vpop.f32.mrb[0].mxu0
    %v1235 = vpop.f32.mrb[0].mxu0
    %v1236 = vadd.f32 %v324, %v1235
    %v1237 = vpop.f32.mrb[0].mxu0
    %1238 = vmatprep.mubr.bf16.mxu0 0
    %1239 = vmatmul.mubr.bf16.gmra.mrb[0].mxu0 %v846
    %v1240 = vpop.f32.mrb[0].mxu0
    %v1241 = vadd.f32 %v324, %v1240
    %v1242 = vpop.f32.mrb[0].mxu0
    %v1243 = vpop.f32.mrb[0].mxu0
    %v1244 = vadd.f32 %v324, %v1243
    %v1245 = vpop.f32.mrb[0].mxu0
    %1246 = vmatprep.mubr.bf16.mxu0 0
    %1247 = vmatmul.mubr.bf16.gmra.mrb[0].mxu0 %v847
    %v1248 = vpop.f32.mrb[0].mxu0
    %v1249 = vadd.f32 %v324, %v1248
    %v1250 = vpop.f32.mrb[0].mxu0
    %v1251 = vpop.f32.mrb[0].mxu0
    %v1252 = vadd.f32 %v324, %v1251
    %v1253 = vpop.f32.mrb[0].mxu0
    %1254 = vmatprep.mubr.bf16.mxu0 0
    %1255 = vmatmul.mubr.bf16.gmra.mrb[0].mxu0 %v848
    %v1256 = vpop.f32.mrb[0].mxu0
    %v1257 = vadd.f32 %v324, %v1256
    %v1258 = vpop.f32.mrb[0].mxu0
    %v1259 = vpop.f32.mrb[0].mxu0
    %v1260 = vadd.f32 %v324, %v1259
    %v1261 = vpop.f32.mrb[0].mxu0
    %1262 = vmatprep.mubr.bf16.mxu0 0
    %1263 = vmatmul.mubr.bf16.gmra.mrb[0].mxu0 %v849
    %v1264 = vpop.f32.mrb[0].mxu0
    %v1265 = vadd.f32 %v324, %v1264
    %v1266 = vpop.f32.mrb[0].mxu0
    %v1267 = vpop.f32.mrb[0].mxu0
    %v1268 = vadd.f32 %v324, %v1267
    %v1269 = vpop.f32.mrb[0].mxu0
    %1270 = vmatprep.mubr.bf16.mxu0 0
    %1271 = vmatmul.mubr.bf16.gmra.mrb[0].mxu0 %v850
    %v1272 = vpop.f32.mrb[0].mxu0
    %v1273 = vadd.f32 %v324, %v1272
    %v1274 = vpop.f32.mrb[0].mxu0
    %v1275 = vpop.f32.mrb[0].mxu0
    %v1276 = vadd.f32 %v324, %v1275
    %v1277 = vpop.f32.mrb[0].mxu0
    %1278 = vmatprep.mubr.bf16.mxu0 0
    %1279 = vmatmul.mubr.bf16.gmra.mrb[0].mxu0 %v851
    %v1280 = vpop.f32.mrb[0].mxu0
    %v1281 = vadd.f32 %v324, %v1280
    %v1282 = vpop.f32.mrb[0].mxu0
    %v1283 = vpop.f32.mrb[0].mxu0
    %v1284 = vadd.f32 %v324, %v1283
    %v1285 = vpop.f32.mrb[0].mxu0
    %1286 = vmatprep.mubr.bf16.mxu0 0
    %1287 = vmatmul.mubr.bf16.gmra.mrb[0].mxu0 %v852
    %v1288 = vpop.f32.mrb[0].mxu0
    %v1289 = vadd.f32 %v324, %v1288
    %v1290 = vpop.f32.mrb[0].mxu0
    %v1291 = vpop.f32.mrb[0].mxu0
    %v1292 = vadd.f32 %v324, %v1291
    %v1293 = vpop.f32.mrb[0].mxu0
    %1294 = vmatprep.mubr.bf16.mxu0 0
    %1295 = vmatmul.mubr.bf16.gmra.mrb[0].mxu0 %v853
    %v1296 = vpop.f32.mrb[0].mxu0
    %v1297 = vadd.f32 %v324, %v1296
    %v1298 = vpop.f32.mrb[0].mxu0
    %v1299 = vpop.f32.mrb[0].mxu0
    %v1300 = vadd.f32 %v324, %v1299
    %v1301 = vpop.f32.mrb[0].mxu0
    %1302 = vmatprep.mubr.bf16.mxu0 0
    %1303 = vmatmul.mubr.bf16.gmra.mrb[0].mxu0 %v854
    %v1304 = vpop.f32.mrb[0].mxu0
    %v1305 = vadd.f32 %v324, %v1304
    %v1306 = vpop.f32.mrb[0].mxu0
    %v1307 = vpop.f32.mrb[0].mxu0
    %v1308 = vadd.f32 %v324, %v1307
    %v1309 = vpop.f32.mrb[0].mxu0
    %1310 = vmatprep.mubr.bf16.mxu0 0
    %1311 = vmatmul.mubr.bf16.gmra.mrb[0].mxu0 %v855
    %v1312 = vpop.f32.mrb[0].mxu0
    %v1313 = vadd.f32 %v324, %v1312
    %v1314 = vpop.f32.mrb[0].mxu0
    %v1315 = vpop.f32.mrb[0].mxu0
    %v1316 = vadd.f32 %v324, %v1315
    %v1317 = vpop.f32.mrb[0].mxu0
    %1318 = vmatprep.mubr.bf16.mxu0 0
    %1319 = vmatmul.mubr.bf16.gmra.mrb[0].mxu0 %v856
    %v1320 = vpop.f32.mrb[0].mxu0
    %v1321 = vadd.f32 %v324, %v1320
    %v1322 = vpop.f32.mrb[0].mxu0
    %v1323 = vpop.f32.mrb[0].mxu0
    %v1324 = vadd.f32 %v324, %v1323
    %v1325 = vpop.f32.mrb[0].mxu0
    %1326 = vmatprep.mubr.bf16.mxu0 0
    %1327 = vmatmul.mubr.bf16.gmra.mrb[0].mxu0 %v857
    %v1328 = vpop.f32.mrb[0].mxu0
    %v1329 = vadd.f32 %v324, %v1328
    %v1330 = vpop.f32.mrb[0].mxu0
    %v1331 = vpop.f32.mrb[0].mxu0
    %v1332 = vadd.f32 %v324, %v1331
    %v1333 = vpop.f32.mrb[0].mxu0
    %1334 = vmatprep.mubr.bf16.mxu0 0
    %1335 = vmatmul.mubr.bf16.gmra.mrb[0].mxu0 %v858
    %v1336 = vpop.f32.mrb[0].mxu0
    %v1337 = vadd.f32 %v324, %v1336
    %v1338 = vpop.f32.mrb[0].mxu0
    %v1339 = vpop.f32.mrb[0].mxu0
    %v1340 = vadd.f32 %v324, %v1339
    %v1341 = vpop.f32.mrb[0].mxu0
    %1342 = vmatprep.mubr.bf16.mxu0 0
    %1343 = vmatmul.mubr.bf16.gmra.mrb[0].mxu0 %v859
    %v1344 = vpop.f32.mrb[0].mxu0
    %v1345 = vadd.f32 %v324, %v1344
    %v1346 = vpop.f32.mrb[0].mxu0
    %v1347 = vpop.f32.mrb[0].mxu0
    %v1348 = vadd.f32 %v324, %v1347
    %v1349 = vpop.f32.mrb[0].mxu0
    %1350 = vmatprep.mubr.bf16.mxu0 0
    %1351 = vmatmul.mubr.bf16.gmra.mrb[0].mxu0 %v860
    %v1352 = vpop.f32.mrb[0].mxu0
    %v1353 = vadd.f32 %v324, %v1352
    %v1354 = vpop.f32.mrb[0].mxu0
    %v1355 = vpop.f32.mrb[0].mxu0
    %v1356 = vadd.f32 %v324, %v1355
    %v1357 = vpop.f32.mrb[0].mxu0
    %1358 = vmatprep.mubr.bf16.mxu0 0
    %1359 = vmatmul.mubr.bf16.gmra.mrb[0].mxu0 %v861
    %v1360 = vpop.f32.mrb[0].mxu0
    %v1361 = vadd.f32 %v324, %v1360
    %v1362 = vpop.f32.mrb[0].mxu0
    %v1363 = vpop.f32.mrb[0].mxu0
    %v1364 = vadd.f32 %v324, %v1363
    %v1365 = vpop.f32.mrb[0].mxu0
    %1366 = vmatprep.mubr.bf16.mxu0 0
    %1367 = vmatmul.mubr.bf16.gmra.mrb[0].mxu0 %v862
    %v1368 = vpop.f32.mrb[0].mxu0
    %v1369 = vadd.f32 %v324, %v1368
    %v1370 = vpop.f32.mrb[0].mxu0
    %v1371 = vpop.f32.mrb[0].mxu0
    %v1372 = vadd.f32 %v324, %v1371
    %v1373 = vpop.f32.mrb[0].mxu0
    %1374 = vmatprep.mubr.bf16.mxu0 0
    %1375 = vmatmul.mubr.bf16.gmra.mrb[0].mxu0 %v863
    %v1376 = vpop.f32.mrb[0].mxu0
    %v1377 = vadd.f32 %v324, %v1376
    %v1378 = vpop.f32.mrb[0].mxu0
    %v1379 = vpop.f32.mrb[0].mxu0
    %v1380 = vadd.f32 %v324, %v1379
    %v1381 = vpop.f32.mrb[0].mxu0
    %1382 = vmatprep.mubr.bf16.mxu0 0
    %1383 = vmatmul.mubr.bf16.gmra.mrb[0].mxu0 %v864
    %v1384 = vpop.f32.mrb[0].mxu0
    %v1385 = vadd.f32 %v324, %v1384
    %v1386 = vpop.f32.mrb[0].mxu0
    %v1387 = vpop.f32.mrb[0].mxu0
    %v1388 = vadd.f32 %v324, %v1387
    %v1389 = vpop.f32.mrb[0].mxu0
    %1390 = vmatprep.mubr.bf16.mxu0 0
    %1391 = vmatmul.mubr.bf16.gmra.mrb[0].mxu0 %v865
    %v1392 = vpop.f32.mrb[0].mxu0
    %v1393 = vadd.f32 %v324, %v1392
    %v1394 = vpop.f32.mrb[0].mxu0
    %v1395 = vpop.f32.mrb[0].mxu0
    %v1396 = vadd.f32 %v324, %v1395
    %v1397 = vpop.f32.mrb[0].mxu0
    %1398 = vmatprep.mubr.bf16.mxu0 0
    %1399 = vmatmul.mubr.bf16.gmra.mrb[0].mxu0 %v866
    %v1400 = vpop.f32.mrb[0].mxu0
    %v1401 = vadd.f32 %v324, %v1400
    %v1402 = vpop.f32.mrb[0].mxu0
    %v1403 = vpop.f32.mrb[0].mxu0
    %v1404 = vadd.f32 %v324, %v1403
    %v1405 = vpop.f32.mrb[0].mxu0
    %1406 = vmatprep.mubr.bf16.mxu0 0
    %1407 = vmatmul.mubr.bf16.gmra.mrb[0].mxu0 %v867
    %v1408 = vpop.f32.mrb[0].mxu0
    %v1409 = vadd.f32 %v324, %v1408
    %v1410 = vpop.f32.mrb[0].mxu0
    %v1411 = vpop.f32.mrb[0].mxu0
    %v1412 = vadd.f32 %v324, %v1411
    %v1413 = vpop.f32.mrb[0].mxu0
    %1414 = vmatprep.mubr.bf16.mxu0 0
    %1415 = vmatmul.mubr.bf16.gmra.mrb[0].mxu0 %v868
    %v1416 = vpop.f32.mrb[0].mxu0
    %v1417 = vadd.f32 %v324, %v1416
    %v1418 = vpop.f32.mrb[0].mxu0
    %v1419 = vpop.f32.mrb[0].mxu0
    %v1420 = vadd.f32 %v324, %v1419
    %v1421 = vpop.f32.mrb[0].mxu0
    %1422 = vmatprep.mubr.bf16.mxu0 0
    %1423 = vmatmul.mubr.bf16.gmra.mrb[0].mxu0 %v869
    %v1424 = vpop.f32.mrb[0].mxu0
    %v1425 = vadd.f32 %v324, %v1424
    %v1426 = vpop.f32.mrb[0].mxu0
    %v1427 = vpop.f32.mrb[0].mxu0
    %v1428 = vadd.f32 %v324, %v1427
    %v1429 = vpop.f32.mrb[0].mxu0
    %1430 = vmatprep.mubr.bf16.mxu0 0
    %1431 = vmatmul.mubr.bf16.gmra.mrb[0].mxu0 %v870
    %v1432 = vpop.f32.mrb[0].mxu0
    %v1433 = vadd.f32 %v324, %v1432
    %v1434 = vpop.f32.mrb[0].mxu0
    %v1435 = vpop.f32.mrb[0].mxu0
    %v1436 = vadd.f32 %v324, %v1435
    %v1437 = vpop.f32.mrb[0].mxu0
    %1438 = vmatprep.mubr.bf16.mxu0 0
    %1439 = vmatmul.mubr.bf16.gmra.mrb[0].mxu0 %v871
    %v1440 = vpop.f32.mrb[0].mxu0
    %v1441 = vadd.f32 %v324, %v1440
    %v1442 = vpop.f32.mrb[0].mxu0
    %v1443 = vpop.f32.mrb[0].mxu0
    %v1444 = vadd.f32 %v324, %v1443
    %v1445 = vpop.f32.mrb[0].mxu0
    %1446 = vmatprep.mubr.bf16.mxu0 0
    %1447 = vmatmul.mubr.bf16.gmra.mrb[0].mxu0 %v872
    %v1448 = vpop.f32.mrb[0].mxu0
    %v1449 = vadd.f32 %v324, %v1448
    %v1450 = vpop.f32.mrb[0].mxu0
    %v1451 = vpop.f32.mrb[0].mxu0
    %v1452 = vadd.f32 %v324, %v1451
    %v1453 = vpop.f32.mrb[0].mxu0
    %1454 = vmatprep.mubr.bf16.mxu0 0
    %1455 = vmatmul.mubr.bf16.gmra.mrb[0].mxu0 %v873
    %v1456 = vpop.f32.mrb[0].mxu0
    %v1457 = vadd.f32 %v324, %v1456
    %v1458 = vpop.f32.mrb[0].mxu0
    %v1459 = vpop.f32.mrb[0].mxu0
    %v1460 = vadd.f32 %v324, %v1459
    %v1461 = vpop.f32.mrb[0].mxu0
    %1462 = vmatprep.mubr.bf16.mxu0 0
    %1463 = vmatmul.mubr.bf16.gmra.mrb[0].mxu0 %v874
    %v1464 = vpop.f32.mrb[0].mxu0
    %v1465 = vadd.f32 %v324, %v1464
    %v1466 = vpop.f32.mrb[0].mxu0
    %v1467 = vpop.f32.mrb[0].mxu0
    %v1468 = vadd.f32 %v324, %v1467
    %v1469 = vpop.f32.mrb[0].mxu0
    %1470 = vmatprep.mubr.bf16.mxu0 0
    %1471 = vmatmul.mubr.bf16.gmra.mrb[0].mxu0 %v875
    %v1472 = vpop.f32.mrb[0].mxu0
    %v1473 = vadd.f32 %v324, %v1472
    %v1474 = vpop.f32.mrb[0].mxu0
    %v1475 = vpop.f32.mrb[0].mxu0
    %v1476 = vadd.f32 %v324, %v1475
    %v1477 = vpop.f32.mrb[0].mxu0
    %1478 = vmatprep.mubr.bf16.mxu0 0
    %1479 = vmatmul.mubr.bf16.gmra.mrb[0].mxu0 %v876
    %v1480 = vpop.f32.mrb[0].mxu0
    %v1481 = vadd.f32 %v324, %v1480
    %v1482 = vpop.f32.mrb[0].mxu0
    %v1483 = vpop.f32.mrb[0].mxu0
    %v1484 = vadd.f32 %v324, %v1483
    %v1485 = vpop.f32.mrb[0].mxu0
    %1486 = vmatprep.mubr.bf16.mxu0 0
    %1487 = vmatmul.mubr.bf16.gmra.mrb[0].mxu0 %v877
    %v1488 = vpop.f32.mrb[0].mxu0
    %v1489 = vadd.f32 %v324, %v1488
    %v1490 = vpop.f32.mrb[0].mxu0
    %v1491 = vpop.f32.mrb[0].mxu0
    %v1492 = vadd.f32 %v324, %v1491
    %v1493 = vpop.f32.mrb[0].mxu0
    %1494 = vmatprep.mubr.bf16.mxu0 0
    %1495 = vmatmul.mubr.bf16.gmra.mrb[0].mxu0 %v878
    %v1496 = vpop.f32.mrb[0].mxu0
    %v1497 = vadd.f32 %v324, %v1496
    %v1498 = vpop.f32.mrb[0].mxu0
    %v1499 = vpop.f32.mrb[0].mxu0
    %v1500 = vadd.f32 %v324, %v1499
    %v1501 = vpop.f32.mrb[0].mxu0
    %1502 = vmatprep.mubr.bf16.mxu0 0
    %1503 = vmatmul.mubr.bf16.gmra.mrb[0].mxu0 %v879
    %v1504 = vpop.f32.mrb[0].mxu0
    %v1505 = vadd.f32 %v324, %v1504
    %v1506 = vpop.f32.mrb[0].mxu0
    %v1507 = vpop.f32.mrb[0].mxu0
    %v1508 = vadd.f32 %v324, %v1507
    %v1509 = vpop.f32.mrb[0].mxu0
    %1510 = vmatprep.mubr.bf16.mxu0 0
    %1511 = vmatmul.mubr.bf16.gmra.mrb[0].mxu0 %v880
    %v1512 = vpop.f32.mrb[0].mxu0
    %v1513 = vadd.f32 %v324, %v1512
    %v1514 = vpop.f32.mrb[0].mxu0
    %v1515 = vpop.f32.mrb[0].mxu0
    %v1516 = vadd.f32 %v324, %v1515
    %v1517 = vpop.f32.mrb[0].mxu0
    %1518 = vmatprep.mubr.bf16.mxu0 0
    %1519 = vmatmul.mubr.bf16.gmra.mrb[0].mxu0 %v881
    %v1520 = vpop.f32.mrb[0].mxu0
    %v1521 = vadd.f32 %v324, %v1520
    %v1522 = vpop.f32.mrb[0].mxu0
    %v1523 = vpop.f32.mrb[0].mxu0
    %v1524 = vadd.f32 %v324, %v1523
    %v1525 = vpop.f32.mrb[0].mxu0
    %1526 = vmatprep.mubr.bf16.mxu0 0
    %1527 = vmatmul.mubr.bf16.gmra.mrb[0].mxu0 %v882
    %v1528 = vpop.f32.mrb[0].mxu0
    %v1529 = vadd.f32 %v324, %v1528
    %v1530 = vpop.f32.mrb[0].mxu0
    %v1531 = vpop.f32.mrb[0].mxu0
    %v1532 = vadd.f32 %v324, %v1531
    %v1533 = vpop.f32.mrb[0].mxu0
    %1534 = vmatprep.mubr.bf16.mxu0 0
    %1535 = vmatmul.mubr.bf16.gmra.mrb[0].mxu0 %v883
    %v1536 = vpop.f32.mrb[0].mxu0
    %v1537 = vadd.f32 %v324, %v1536
    %v1538 = vpop.f32.mrb[0].mxu0
    %v1539 = vpop.f32.mrb[0].mxu0
    %v1540 = vadd.f32 %v324, %v1539
    %v1541 = vpop.f32.mrb[0].mxu0
    %1542 = vmatprep.mubr.bf16.mxu0 0
    %1543 = vmatmul.mubr.bf16.gmra.mrb[0].mxu0 %v884
    %v1544 = vpop.f32.mrb[0].mxu0
    %v1545 = vadd.f32 %v324, %v1544
    %v1546 = vpop.f32.mrb[0].mxu0
    %v1547 = vpop.f32.mrb[0].mxu0
    %v1548 = vadd.f32 %v324, %v1547
    %v1549 = vpop.f32.mrb[0].mxu0
    %1550 = vmatprep.mubr.bf16.mxu0 0
    %1551 = vmatmul.mubr.bf16.gmra.mrb[0].mxu0 %v885
    %v1552 = vpop.f32.mrb[0].mxu0
    %v1553 = vadd.f32 %v324, %v1552
    %v1554 = vpop.f32.mrb[0].mxu0
    %v1555 = vpop.f32.mrb[0].mxu0
    %v1556 = vadd.f32 %v324, %v1555
    %v1557 = vpop.f32.mrb[0].mxu0
    %1558 = vmatprep.mubr.bf16.mxu0 0
    %1559 = vmatmul.mubr.bf16.gmra.mrb[0].mxu0 %v886
    %v1560 = vpop.f32.mrb[0].mxu0
    %v1561 = vadd.f32 %v324, %v1560
    %v1562 = vpop.f32.mrb[0].mxu0
    %v1563 = vpop.f32.mrb[0].mxu0
    %v1564 = vadd.f32 %v324, %v1563
    %v1565 = vpop.f32.mrb[0].mxu0
    %1566 = vmatprep.mubr.bf16.mxu0 0
    %1567 = vmatmul.mubr.bf16.gmra.mrb[0].mxu0 %v887
    %v1568 = vpop.f32.mrb[0].mxu0
    %v1569 = vadd.f32 %v324, %v1568
    %v1570 = vpop.f32.mrb[0].mxu0
    %v1571 = vpop.f32.mrb[0].mxu0
    %v1572 = vadd.f32 %v324, %v1571
    %v1573 = vpop.f32.mrb[0].mxu0
    %1574 = vmatprep.mubr.bf16.mxu0 0
    %1575 = vmatmul.mubr.bf16.gmra.mrb[0].mxu0 %v888
    %v1576 = vpop.f32.mrb[0].mxu0
    %v1577 = vadd.f32 %v324, %v1576
    %v1578 = vpop.f32.mrb[0].mxu0
    %v1579 = vpop.f32.mrb[0].mxu0
    %v1580 = vadd.f32 %v324, %v1579
    %v1581 = vpop.f32.mrb[0].mxu0
    %1582 = vmatprep.mubr.bf16.mxu0 0
    %1583 = vmatmul.mubr.bf16.gmra.mrb[0].mxu0 %v889
    %v1584 = vpop.f32.mrb[0].mxu0
    %v1585 = vadd.f32 %v324, %v1584
    %v1586 = vpop.f32.mrb[0].mxu0
    %v1587 = vpop.f32.mrb[0].mxu0
    %v1588 = vadd.f32 %v324, %v1587
    %v1589 = vpop.f32.mrb[0].mxu0
    %1590 = vmatprep.mubr.bf16.mxu0 0
    %1591 = vmatmul.mubr.bf16.gmra.mrb[0].mxu0 %v890
    %v1592 = vpop.f32.mrb[0].mxu0
    %v1593 = vadd.f32 %v324, %v1592
    %v1594 = vpop.f32.mrb[0].mxu0
    %v1595 = vpop.f32.mrb[0].mxu0
    %v1596 = vadd.f32 %v324, %v1595
    %v1597 = vpop.f32.mrb[0].mxu0
    %1598 = vmatprep.mubr.bf16.mxu0 0
    %1599 = vmatmul.mubr.bf16.gmra.mrb[0].mxu0 %v891
    %v1600 = vpop.f32.mrb[0].mxu0
    %v1601 = vadd.f32 %v324, %v1600
    %v1602 = vpop.f32.mrb[0].mxu0
    %v1603 = vpop.f32.mrb[0].mxu0
    %v1604 = vadd.f32 %v324, %v1603
    %v1605 = vpop.f32.mrb[0].mxu0
    %1606 = vmatprep.mubr.bf16.mxu0 0
    %1607 = vmatmul.mubr.bf16.gmra.mrb[0].mxu0 %v892
    %v1608 = vpop.f32.mrb[0].mxu0
    %v1609 = vadd.f32 %v324, %v1608
    %v1610 = vpop.f32.mrb[0].mxu0
    %v1611 = vpop.f32.mrb[0].mxu0
    %v1612 = vadd.f32 %v324, %v1611
    %v1613 = vpop.f32.mrb[0].mxu0
    %1614 = vmatprep.mubr.bf16.mxu0 0
    %1615 = vmatmul.mubr.bf16.gmra.mrb[0].mxu0 %v893
    %v1616 = vpop.f32.mrb[0].mxu0
    %v1617 = vadd.f32 %v324, %v1616
    %v1618 = vpop.f32.mrb[0].mxu0
    %v1619 = vpop.f32.mrb[0].mxu0
    %v1620 = vadd.f32 %v324, %v1619
    %v1621 = vpop.f32.mrb[0].mxu0
    %1622 = vmatprep.mubr.bf16.mxu0 0
    %1623 = vmatmul.mubr.bf16.gmra.mrb[0].mxu0 %v894
    %v1624 = vpop.f32.mrb[0].mxu0
    %v1625 = vadd.f32 %v324, %v1624
    %v1626 = vpop.f32.mrb[0].mxu0
    %v1627 = vpop.f32.mrb[0].mxu0
    %v1628 = vadd.f32 %v324, %v1627
    %v1629 = vpop.f32.mrb[0].mxu0
    %1630 = vmatprep.mubr.bf16.mxu0 0
    %1631 = vmatmul.mubr.bf16.gmra.mrb[0].mxu0 %v895
    %v1632 = vpop.f32.mrb[0].mxu0
    %v1633 = vadd.f32 %v324, %v1632
    %v1634 = vpop.f32.mrb[0].mxu0
    %v1635 = vpop.f32.mrb[0].mxu0
    %v1636 = vadd.f32 %v324, %v1635
    %v1637 = vpop.f32.mrb[0].mxu0
    %1638 = vmatprep.mubr.bf16.mxu0 0
    %1639 = vmatmul.mubr.bf16.gmra.mrb[0].mxu0 %v896
    %v1640 = vpop.f32.mrb[0].mxu0
    %v1641 = vadd.f32 %v324, %v1640
    %v1642 = vpop.f32.mrb[0].mxu0
    %v1643 = vpop.f32.mrb[0].mxu0
    %v1644 = vadd.f32 %v324, %v1643
    %v1645 = vpop.f32.mrb[0].mxu0
    %1646 = vmatprep.mubr.bf16.mxu0 0
    %1647 = vmatmul.mubr.bf16.gmra.mrb[0].mxu0 %v897
    %v1648 = vpop.f32.mrb[0].mxu0
    %v1649 = vadd.f32 %v324, %v1648
    %v1650 = vpop.f32.mrb[0].mxu0
    %v1651 = vpop.f32.mrb[0].mxu0
    %v1652 = vadd.f32 %v324, %v1651
    %v1653 = vpop.f32.mrb[0].mxu0
    %1654 = vmatprep.mubr.bf16.mxu0 0
    %1655 = vmatmul.mubr.bf16.gmra.mrb[0].mxu0 %v898
    %v1656 = vpop.f32.mrb[0].mxu0
    %v1657 = vadd.f32 %v324, %v1656
    %v1658 = vpop.f32.mrb[0].mxu0
    %v1659 = vpop.f32.mrb[0].mxu0
    %v1660 = vadd.f32 %v324, %v1659
    %v1661 = vpop.f32.mrb[0].mxu0
    %1662 = vmatprep.mubr.bf16.mxu0 0
    %1663 = vmatmul.mubr.bf16.gmra.mrb[0].mxu0 %v899
    %v1664 = vpop.f32.mrb[0].mxu0
    %v1665 = vadd.f32 %v324, %v1664
    %v1666 = vpop.f32.mrb[0].mxu0
    %v1667 = vpop.f32.mrb[0].mxu0
    %v1668 = vadd.f32 %v324, %v1667
    %v1669 = vpop.f32.mrb[0].mxu0
    %1670 = vmatprep.mubr.bf16.mxu0 0
    %1671 = vmatmul.mubr.bf16.gmra.mrb[0].mxu0 %v900
    %v1672 = vpop.f32.mrb[0].mxu0
    %v1673 = vadd.f32 %v324, %v1672
    %v1674 = vpop.f32.mrb[0].mxu0
    %v1675 = vpop.f32.mrb[0].mxu0
    %v1676 = vadd.f32 %v324, %v1675
    %v1677 = vpop.f32.mrb[0].mxu0
    %1678 = vmatprep.mubr.bf16.mxu0 0
    %1679 = vmatmul.mubr.bf16.gmra.mrb[0].mxu0 %v901
    %v1680 = vpop.f32.mrb[0].mxu0
    %v1681 = vadd.f32 %v324, %v1680
    %v1682 = vpop.f32.mrb[0].mxu0
    %v1683 = vpop.f32.mrb[0].mxu0
    %v1684 = vadd.f32 %v324, %v1683
    %v1685 = vpop.f32.mrb[0].mxu0
    %1686 = vmatprep.mubr.bf16.mxu0 0
    %1687 = vmatmul.mubr.bf16.gmra.mrb[0].mxu0 %v902
    %v1688 = vpop.f32.mrb[0].mxu0
    %v1689 = vadd.f32 %v324, %v1688
    %v1690 = vpop.f32.mrb[0].mxu0
    %v1691 = vpop.f32.mrb[0].mxu0
    %v1692 = vadd.f32 %v324, %v1691
    %v1693 = vpop.f32.mrb[0].mxu0
    %1694 = vmatprep.mubr.bf16.mxu0 0
    %1695 = vmatmul.mubr.bf16.gmra.mrb[0].mxu0 %v903
    %v1696 = vpop.f32.mrb[0].mxu0
    %v1697 = vadd.f32 %v324, %v1696
    %v1698 = vpop.f32.mrb[0].mxu0
    %v1699 = vpop.f32.mrb[0].mxu0
    %v1700 = vadd.f32 %v324, %v1699
    %v1701 = vpop.f32.mrb[0].mxu0
    %1702 = vmatprep.mubr.bf16.mxu0 0
    %1703 = vmatmul.mubr.bf16.gmra.mrb[0].mxu0 %v904
    %v1704 = vpop.f32.mrb[0].mxu0
    %v1705 = vadd.f32 %v324, %v1704
    %v1706 = vpop.f32.mrb[0].mxu0
    %v1707 = vpop.f32.mrb[0].mxu0
    %v1708 = vadd.f32 %v324, %v1707
    %v1709 = vpop.f32.mrb[0].mxu0
    %1710 = vmatprep.mubr.bf16.mxu0 0
    %1711 = vmatmul.mubr.bf16.gmra.mrb[0].mxu0 %v905
    %v1712 = vpop.f32.mrb[0].mxu0
    %v1713 = vadd.f32 %v324, %v1712
    %v1714 = vpop.f32.mrb[0].mxu0
    %v1715 = vpop.f32.mrb[0].mxu0
    %v1716 = vadd.f32 %v324, %v1715
    %v1717 = vpop.f32.mrb[0].mxu0
    %1718 = vmatprep.mubr.bf16.mxu0 0
    %1719 = vmatmul.mubr.bf16.gmra.mrb[0].mxu0 %v906
    %v1720 = vpop.f32.mrb[0].mxu0
    %v1721 = vadd.f32 %v324, %v1720
    %v1722 = vpop.f32.mrb[0].mxu0
    %v1723 = vpop.f32.mrb[0].mxu0
    %v1724 = vadd.f32 %v324, %v1723
    %v1725 = vpop.f32.mrb[0].mxu0
    %1726 = vmatprep.mubr.bf16.mxu0 0
    %1727 = vmatmul.mubr.bf16.gmra.mrb[0].mxu0 %v907
    %v1728 = vpop.f32.mrb[0].mxu0
    %v1729 = vadd.f32 %v324, %v1728
    %v1730 = vpop.f32.mrb[0].mxu0
    %v1731 = vpop.f32.mrb[0].mxu0
    %v1732 = vadd.f32 %v324, %v1731
    %v1733 = vpop.f32.mrb[0].mxu0
    %1734 = vmatprep.mubr.bf16.mxu0 0
    %1735 = vmatmul.mubr.bf16.gmra.mrb[0].mxu0 %v908
    %v1736 = vpop.f32.mrb[0].mxu0
    %v1737 = vadd.f32 %v324, %v1736
    %v1738 = vpop.f32.mrb[0].mxu0
    %v1739 = vpop.f32.mrb[0].mxu0
    %v1740 = vadd.f32 %v324, %v1739
    %v1741 = vpop.f32.mrb[0].mxu0
    %1742 = vmatprep.mubr.bf16.mxu0 0
    %1743 = vmatmul.mubr.bf16.gmra.mrb[0].mxu0 %v909
    %v1744 = vpop.f32.mrb[0].mxu0
    %v1745 = vadd.f32 %v324, %v1744
    %v1746 = vpop.f32.mrb[0].mxu0
    %v1747 = vpop.f32.mrb[0].mxu0
    %v1748 = vadd.f32 %v324, %v1747
    %v1749 = vpop.f32.mrb[0].mxu0
    %1750 = vmatprep.mubr.bf16.mxu0 0
    %1751 = vmatmul.mubr.bf16.gmra.mrb[0].mxu0 %v910
    %v1752 = vpop.f32.mrb[0].mxu0
    %v1753 = vadd.f32 %v324, %v1752
    %v1754 = vpop.f32.mrb[0].mxu0
    %v1755 = vpop.f32.mrb[0].mxu0
    %v1756 = vadd.f32 %v324, %v1755
    %v1757 = vpop.f32.mrb[0].mxu0
    %1758 = vmatprep.mubr.bf16.mxu0 0
    %1759 = vmatmul.mubr.bf16.gmra.mrb[0].mxu0 %v911
    %v1760 = vpop.f32.mrb[0].mxu0
    %v1761 = vadd.f32 %v324, %v1760
    %v1762 = vpop.f32.mrb[0].mxu0
    %v1763 = vpop.f32.mrb[0].mxu0
    %v1764 = vadd.f32 %v324, %v1763
    %v1765 = vpop.f32.mrb[0].mxu0
    %1766 = vmatprep.mubr.bf16.mxu0 0
    %1767 = vmatmul.mubr.bf16.gmra.mrb[0].mxu0 %v912
    %v1768 = vpop.f32.mrb[0].mxu0
    %v1769 = vadd.f32 %v324, %v1768
    %v1770 = vpop.f32.mrb[0].mxu0
    %v1771 = vpop.f32.mrb[0].mxu0
    %v1772 = vadd.f32 %v324, %v1771
    %v1773 = vpop.f32.mrb[0].mxu0
    %1774 = vmatprep.mubr.bf16.mxu0 0
    %1775 = vmatmul.mubr.bf16.gmra.mrb[0].mxu0 %v913
    %v1776 = vpop.f32.mrb[0].mxu0
    %v1777 = vadd.f32 %v324, %v1776
    %v1778 = vpop.f32.mrb[0].mxu0
    %v1779 = vpop.f32.mrb[0].mxu0
    %v1780 = vadd.f32 %v324, %v1779
    %v1781 = vpop.f32.mrb[0].mxu0
    %1782 = vmatprep.mubr.bf16.mxu0 0
    %1783 = vmatmul.mubr.bf16.gmra.mrb[0].mxu0 %v914
    %v1784 = vpop.f32.mrb[0].mxu0
    %v1785 = vadd.f32 %v324, %v1784
    %v1786 = vpop.f32.mrb[0].mxu0
    %v1787 = vpop.f32.mrb[0].mxu0
    %v1788 = vadd.f32 %v324, %v1787
    %v1789 = vpop.f32.mrb[0].mxu0
    %1790 = vmatprep.mubr.bf16.mxu0 0
    %1791 = vmatmul.mubr.bf16.gmra.mrb[0].mxu0 %v915
    %v1792 = vpop.f32.mrb[0].mxu0
    %v1793 = vadd.f32 %v324, %v1792
    %v1794 = vpop.f32.mrb[0].mxu0
    %v1795 = vpop.f32.mrb[0].mxu0
    %v1796 = vadd.f32 %v324, %v1795
    %v1797 = vpop.f32.mrb[0].mxu0
    %1798 = vmatprep.mubr.bf16.mxu0 0
    %1799 = vmatmul.mubr.bf16.gmra.mrb[0].mxu0 %v916
    %v1800 = vpop.f32.mrb[0].mxu0
    %v1801 = vadd.f32 %v324, %v1800
    %v1802 = vpop.f32.mrb[0].mxu0
    %v1803 = vpop.f32.mrb[0].mxu0
    %v1804 = vadd.f32 %v324, %v1803
    %v1805 = vpop.f32.mrb[0].mxu0
    %1806 = vmatprep.mubr.bf16.mxu0 0
    %1807 = vmatmul.mubr.bf16.gmra.mrb[0].mxu0 %v917
    %v1808 = vpop.f32.mrb[0].mxu0
    %v1809 = vadd.f32 %v324, %v1808
    %v1810 = vpop.f32.mrb[0].mxu0
    %v1811 = vpop.f32.mrb[0].mxu0
    %v1812 = vadd.f32 %v324, %v1811
    %v1813 = vpop.f32.mrb[0].mxu0
    %1814 = vmatprep.mubr.bf16.mxu0 0
    %1815 = vmatmul.mubr.bf16.gmra.mrb[0].mxu0 %v918
    %v1816 = vpop.f32.mrb[0].mxu0
    %v1817 = vadd.f32 %v324, %v1816
    %v1818 = vpop.f32.mrb[0].mxu0
    %v1819 = vpop.f32.mrb[0].mxu0
    %v1820 = vadd.f32 %v324, %v1819
    %v1821 = vpop.f32.mrb[0].mxu0
    %1822 = vmatprep.mubr.bf16.mxu0 0
    %1823 = vmatmul.mubr.bf16.gmra.mrb[0].mxu0 %v919
    %v1824 = vpop.f32.mrb[0].mxu0
    %v1825 = vadd.f32 %v324, %v1824
    %v1826 = vpop.f32.mrb[0].mxu0
    %v1827 = vpop.f32.mrb[0].mxu0
    %v1828 = vadd.f32 %v324, %v1827
    %v1829 = vpop.f32.mrb[0].mxu0
    %1830 = vmatprep.mubr.bf16.mxu0 0
    %1831 = vmatmul.mubr.bf16.gmra.mrb[0].mxu0 %v920
    %v1832 = vpop.f32.mrb[0].mxu0
    %v1833 = vadd.f32 %v324, %v1832
    %v1834 = vpop.f32.mrb[0].mxu0
    %v1835 = vpop.f32.mrb[0].mxu0
    %v1836 = vadd.f32 %v324, %v1835
    %v1837 = vpop.f32.mrb[0].mxu0
    %1838 = vmatprep.mubr.bf16.mxu0 0
    %1839 = vmatmul.mubr.bf16.gmra.mrb[0].mxu0 %v921
    %v1840 = vpop.f32.mrb[0].mxu0
    %v1841 = vadd.f32 %v324, %v1840
    %v1842 = vpop.f32.mrb[0].mxu0
    %v1843 = vpop.f32.mrb[0].mxu0
    %v1844 = vadd.f32 %v324, %v1843
    %v1845 = vpop.f32.mrb[0].mxu0
    %1846 = vmatprep.mubr.bf16.mxu0 0
    %1847 = vmatmul.mubr.bf16.gmra.mrb[0].mxu0 %v922
    %v1848 = vpop.f32.mrb[0].mxu0
    %v1849 = vadd.f32 %v324, %v1848
    %v1850 = vpop.f32.mrb[0].mxu0
    %v1851 = vpop.f32.mrb[0].mxu0
    %v1852 = vadd.f32 %v324, %v1851
    %v1853 = vpop.f32.mrb[0].mxu0
    %1854 = vmatprep.mubr.bf16.mxu0 0
    %1855 = vmatmul.mubr.bf16.gmra.mrb[0].mxu0 %v923
    %v1856 = vpop.f32.mrb[0].mxu0
    %v1857 = vadd.f32 %v324, %v1856
    %v1858 = vpop.f32.mrb[0].mxu0
    %v1859 = vpop.f32.mrb[0].mxu0
    %v1860 = vadd.f32 %v324, %v1859
    %v1861 = vpop.f32.mrb[0].mxu0
    %1862 = vmatprep.mubr.bf16.mxu0 0
    %1863 = vmatmul.mubr.bf16.gmra.mrb[0].mxu0 %v924
    %v1864 = vpop.f32.mrb[0].mxu0
    %v1865 = vadd.f32 %v324, %v1864
    %v1866 = vpop.f32.mrb[0].mxu0
    %v1867 = vpop.f32.mrb[0].mxu0
    %v1868 = vadd.f32 %v324, %v1867
    %v1869 = vpop.f32.mrb[0].mxu0
    %1870 = vmatprep.mubr.bf16.mxu0 0
    %1871 = vmatmul.mubr.bf16.gmra.mrb[0].mxu0 %v925
    %v1872 = vpop.f32.mrb[0].mxu0
    %v1873 = vadd.f32 %v324, %v1872
    %v1874 = vpop.f32.mrb[0].mxu0
    %v1875 = vpop.f32.mrb[0].mxu0
    %v1876 = vadd.f32 %v324, %v1875
    %v1877 = vpop.f32.mrb[0].mxu0
    %1878 = vmatprep.mubr.bf16.mxu0 0
    %1879 = vmatmul.mubr.bf16.gmra.mrb[0].mxu0 %v926
    %v1880 = vpop.f32.mrb[0].mxu0
    %v1881 = vadd.f32 %v324, %v1880
    %v1882 = vpop.f32.mrb[0].mxu0
    %v1883 = vpop.f32.mrb[0].mxu0
    %v1884 = vadd.f32 %v324, %v1883
    %v1885 = vpop.f32.mrb[0].mxu0
    %1886 = vmatprep.mubr.bf16.mxu0 0
    %1887 = vmatmul.mubr.bf16.gmra.mrb[0].mxu0 %v927
    %v1888 = vpop.f32.mrb[0].mxu0
    %v1889 = vadd.f32 %v324, %v1888
    %v1890 = vpop.f32.mrb[0].mxu0
    %v1891 = vpop.f32.mrb[0].mxu0
    %v1892 = vadd.f32 %v324, %v1891
    %v1893 = vpop.f32.mrb[0].mxu0
    %1894 = vmatprep.mubr.bf16.mxu0 0
    %1895 = vmatmul.mubr.bf16.gmra.mrb[0].mxu0 %v928
    %v1896 = vpop.f32.mrb[0].mxu0
    %v1897 = vadd.f32 %v324, %v1896
    %v1898 = vpop.f32.mrb[0].mxu0
    %v1899 = vpop.f32.mrb[0].mxu0
    %v1900 = vadd.f32 %v324, %v1899
    %v1901 = vpop.f32.mrb[0].mxu0
    %1902 = vmatprep.mubr.bf16.mxu0 0
    %1903 = vmatmul.mubr.bf16.gmra.mrb[0].mxu0 %v929
    %v1904 = vpop.f32.mrb[0].mxu0
    %v1905 = vadd.f32 %v324, %v1904
    %v1906 = vpop.f32.mrb[0].mxu0
    %v1907 = vpop.f32.mrb[0].mxu0
    %v1908 = vadd.f32 %v324, %v1907
    %v1909 = vpop.f32.mrb[0].mxu0
    %1910 = vmatprep.mubr.bf16.mxu0 0
    %1911 = vmatmul.mubr.bf16.gmra.mrb[0].mxu0 %v930
    %v1912 = vpop.f32.mrb[0].mxu0
    %v1913 = vadd.f32 %v324, %v1912
    %v1914 = vpop.f32.mrb[0].mxu0
    %v1915 = vpop.f32.mrb[0].mxu0
    %v1916 = vadd.f32 %v324, %v1915
    %v1917 = vpop.f32.mrb[0].mxu0
    %1918 = vmatprep.mubr.bf16.mxu0 0
    %1919 = vmatmul.mubr.bf16.gmra.mrb[0].mxu0 %v931
    %v1920 = vpop.f32.mrb[0].mxu0
    %v1921 = vadd.f32 %v324, %v1920
    %v1922 = vpop.f32.mrb[0].mxu0
    %v1923 = vpop.f32.mrb[0].mxu0
    %v1924 = vadd.f32 %v324, %v1923
    %v1925 = vpop.f32.mrb[0].mxu0
    %1926 = vmatprep.mubr.bf16.mxu0 0
    %1927 = vmatmul.mubr.bf16.gmra.mrb[0].mxu0 %v932
    %v1928 = vpop.f32.mrb[0].mxu0
    %v1929 = vadd.f32 %v324, %v1928
    %v1930 = vpop.f32.mrb[0].mxu0
    %v1931 = vpop.f32.mrb[0].mxu0
    %v1932 = vadd.f32 %v324, %v1931
    %v1933 = vpop.f32.mrb[0].mxu0
    %1934 = vmatprep.mubr.bf16.mxu0 0
    %1935 = vmatmul.mubr.bf16.gmra.mrb[0].mxu0 %v933
    %v1936 = vpop.f32.mrb[0].mxu0
    %v1937 = vadd.f32 %v324, %v1936
    %v1938 = vpop.f32.mrb[0].mxu0
    %v1939 = vpop.f32.mrb[0].mxu0
    %v1940 = vadd.f32 %v324, %v1939
    %v1941 = vpop.f32.mrb[0].mxu0
    %1942 = vmatprep.mubr.bf16.mxu0 0
    %1943 = vmatmul.mubr.bf16.gmra.mrb[0].mxu0 %v934
    %v1944 = vpop.f32.mrb[0].mxu0
    %v1945 = vadd.f32 %v324, %v1944
    %v1946 = vpop.f32.mrb[0].mxu0
    %v1947 = vpop.f32.mrb[0].mxu0
    %v1948 = vadd.f32 %v324, %v1947
    %v1949 = vpop.f32.mrb[0].mxu0
    %1950 = vmatprep.mubr.bf16.mxu0 0
    %1951 = vmatmul.mubr.bf16.gmra.mrb[0].mxu0 %v935
    %v1952 = vpop.f32.mrb[0].mxu0
    %v1953 = vadd.f32 %v324, %v1952
    %v1954 = vpop.f32.mrb[0].mxu0
    %v1955 = vpop.f32.mrb[0].mxu0
    %v1956 = vadd.f32 %v324, %v1955
    %v1957 = vpop.f32.mrb[0].mxu0
    %1958 = vmatprep.mubr.bf16.mxu0 0
    %1959 = vmatmul.mubr.bf16.gmra.mrb[0].mxu0 %v936
    %v1960 = vpop.f32.mrb[0].mxu0
    %v1961 = vadd.f32 %v324, %v1960
    %v1962 = vpop.f32.mrb[0].mxu0
    %v1963 = vpop.f32.mrb[0].mxu0
    %v1964 = vadd.f32 %v324, %v1963
    %v1965 = vpop.f32.mrb[0].mxu0
    %1966 = vmatprep.mubr.bf16.mxu0 0
    %1967 = vmatmul.mubr.bf16.gmra.mrb[0].mxu0 %v937
    %v1968 = vpop.f32.mrb[0].mxu0
    %v1969 = vadd.f32 %v324, %v1968
    %v1970 = vpop.f32.mrb[0].mxu0
    %v1971 = vpop.f32.mrb[0].mxu0
    %v1972 = vadd.f32 %v324, %v1971
    %v1973 = vpop.f32.mrb[0].mxu0
    %1974 = vmatprep.mubr.bf16.mxu0 0
    %1975 = vmatmul.mubr.bf16.gmra.mrb[0].mxu0 %v938
    %v1976 = vpop.f32.mrb[0].mxu0
    %v1977 = vadd.f32 %v324, %v1976
    %v1978 = vpop.f32.mrb[0].mxu0
    %v1979 = vpop.f32.mrb[0].mxu0
    %v1980 = vadd.f32 %v324, %v1979
    %v1981 = vpop.f32.mrb[0].mxu0
    %1982 = vmatprep.mubr.bf16.mxu0 0
    %1983 = vmatmul.mubr.bf16.gmra.mrb[0].mxu0 %v939
    %v1984 = vpop.f32.mrb[0].mxu0
    %v1985 = vadd.f32 %v324, %v1984
    %v1986 = vpop.f32.mrb[0].mxu0
    %v1987 = vpop.f32.mrb[0].mxu0
    %v1988 = vadd.f32 %v324, %v1987
    %v1989 = vpop.f32.mrb[0].mxu0
    %1990 = vmatprep.mubr.bf16.mxu0 0
    %1991 = vmatmul.mubr.bf16.gmra.mrb[0].mxu0 %v940
    %v1992 = vpop.f32.mrb[0].mxu0
    %v1993 = vadd.f32 %v324, %v1992
    %v1994 = vpop.f32.mrb[0].mxu0
    %v1995 = vpop.f32.mrb[0].mxu0
    %v1996 = vadd.f32 %v324, %v1995
    %v1997 = vpop.f32.mrb[0].mxu0
    %1998 = vmatprep.mubr.bf16.mxu0 0
    %1999 = vmatmul.mubr.bf16.gmra.mrb[0].mxu0 %v941
    %v2000 = vpop.f32.mrb[0].mxu0
    %v2001 = vadd.f32 %v324, %v2000
    %v2002 = vpop.f32.mrb[0].mxu0
    %v2003 = vpop.f32.mrb[0].mxu0
    %v2004 = vadd.f32 %v324, %v2003
    %v2005 = vpop.f32.mrb[0].mxu0
    %2006 = vmatprep.mubr.bf16.mxu0 0
    %2007 = vmatmul.mubr.bf16.gmra.mrb[0].mxu0 %v942
    %v2008 = vpop.f32.mrb[0].mxu0
    %v2009 = vadd.f32 %v324, %v2008
    %v2010 = vpop.f32.mrb[0].mxu0
    %v2011 = vpop.f32.mrb[0].mxu0
    %v2012 = vadd.f32 %v324, %v2011
    %v2013 = vpop.f32.mrb[0].mxu0
    %2014 = vmatprep.mubr.bf16.mxu0 0
    %2015 = vmatmul.mubr.bf16.gmra.mrb[0].mxu0 %v943
    %v2016 = vpop.f32.mrb[0].mxu0
    %v2017 = vadd.f32 %v324, %v2016
    %v2018 = vpop.f32.mrb[0].mxu0
    %v2019 = vpop.f32.mrb[0].mxu0
    %v2020 = vadd.f32 %v324, %v2019
    %v2021 = vpop.f32.mrb[0].mxu0
    %2022 = vmatprep.mubr.bf16.mxu0 0
    %2023 = vmatmul.mubr.bf16.gmra.mrb[0].mxu0 %v944
    %v2024 = vpop.f32.mrb[0].mxu0
    %v2025 = vadd.f32 %v324, %v2024
    %v2026 = vpop.f32.mrb[0].mxu0
    %v2027 = vpop.f32.mrb[0].mxu0
    %v2028 = vadd.f32 %v324, %v2027
    %v2029 = vpop.f32.mrb[0].mxu0
    %2030 = vmatprep.mubr.bf16.mxu0 0
    %2031 = vmatmul.mubr.bf16.gmra.mrb[0].mxu0 %v945
    %v2032 = vpop.f32.mrb[0].mxu0
    %v2033 = vadd.f32 %v324, %v2032
    %v2034 = vpop.f32.mrb[0].mxu0
    %v2035 = vpop.f32.mrb[0].mxu0
    %v2036 = vadd.f32 %v324, %v2035
    %v2037 = vpop.f32.mrb[0].mxu0
    %2038 = vmatprep.mubr.bf16.mxu0 0
    %2039 = vmatmul.mubr.bf16.gmra.mrb[0].mxu0 %v946
    %v2040 = vpop.f32.mrb[0].mxu0
    %v2041 = vadd.f32 %v324, %v2040
    %v2042 = vpop.f32.mrb[0].mxu0
    %v2043 = vpop.f32.mrb[0].mxu0
    %v2044 = vadd.f32 %v324, %v2043
    %v2045 = vpop.f32.mrb[0].mxu0
    %2046 = vmatprep.mubr.bf16.mxu0 0
    %2047 = vmatmul.mubr.bf16.gmra.mrb[0].mxu0 %v947
    %v2048 = vpop.f32.mrb[0].mxu0
    %v2049 = vadd.f32 %v324, %v2048
    %v2050 = vpop.f32.mrb[0].mxu0
    %v2051 = vpop.f32.mrb[0].mxu0
    %v2052 = vadd.f32 %v324, %v2051
    %v2053 = vpop.f32.mrb[0].mxu0
    %2054 = vmatprep.mubr.bf16.mxu0 0
    %2055 = vmatmul.mubr.bf16.gmra.mrb[0].mxu0 %v948
    %v2056 = vpop.f32.mrb[0].mxu0
    %v2057 = vadd.f32 %v324, %v2056
    %v2058 = vpop.f32.mrb[0].mxu0
    %v2059 = vpop.f32.mrb[0].mxu0
    %v2060 = vadd.f32 %v324, %v2059
    %v2061 = vpop.f32.mrb[0].mxu0
    %2062 = vmatprep.mubr.bf16.mxu0 0
    %2063 = vmatmul.mubr.bf16.gmra.mrb[0].mxu0 %v949
    %v2064 = vpop.f32.mrb[0].mxu0
    %v2065 = vadd.f32 %v324, %v2064
    %v2066 = vpop.f32.mrb[0].mxu0
    %v2067 = vpop.f32.mrb[0].mxu0
    %v2068 = vadd.f32 %v324, %v2067
    %v2069 = vpop.f32.mrb[0].mxu0
    %2070 = vmatprep.mubr.bf16.mxu0 0
    %2071 = vmatmul.mubr.bf16.gmra.mrb[0].mxu0 %v950
    %v2072 = vpop.f32.mrb[0].mxu0
    %v2073 = vadd.f32 %v324, %v2072
    %v2074 = vpop.f32.mrb[0].mxu0
    %v2075 = vpop.f32.mrb[0].mxu0
    %v2076 = vadd.f32 %v324, %v2075
    %v2077 = vpop.f32.mrb[0].mxu0
    %2078 = vmatprep.mubr.bf16.mxu0 0
    %2079 = vmatmul.mubr.bf16.gmra.mrb[0].mxu0 %v951
    %v2080 = vpop.f32.mrb[0].mxu0
    %v2081 = vadd.f32 %v324, %v2080
    %v2082 = vpop.f32.mrb[0].mxu0
    %v2083 = vpop.f32.mrb[0].mxu0
    %v2084 = vadd.f32 %v324, %v2083
    %v2085 = vpop.f32.mrb[0].mxu0
    %2086 = vmatprep.mubr.bf16.mxu0 0
    %2087 = vmatmul.mubr.bf16.gmra.mrb[0].mxu0 %v952
    %v2088 = vpop.f32.mrb[0].mxu0
    %v2089 = vadd.f32 %v324, %v2088
    %v2090 = vpop.f32.mrb[0].mxu0
    %v2091 = vpop.f32.mrb[0].mxu0
    %v2092 = vadd.f32 %v324, %v2091
    %v2093 = vpop.f32.mrb[0].mxu0
    %2094 = vmatprep.mubr.bf16.mxu0 0
    %2095 = vmatmul.mubr.bf16.gmra.mrb[0].mxu0 %v953
    %v2096 = vpop.f32.mrb[0].mxu0
    %v2097 = vadd.f32 %v324, %v2096
    %v2098 = vpop.f32.mrb[0].mxu0
    %v2099 = vpop.f32.mrb[0].mxu0
    %v2100 = vadd.f32 %v324, %v2099
    %v2101 = vpop.f32.mrb[0].mxu0
    %2102 = vmatprep.mubr.bf16.mxu0 0
    %2103 = vmatmul.mubr.bf16.gmra.mrb[0].mxu0 %v954
    %v2104 = vpop.f32.mrb[0].mxu0
    %v2105 = vadd.f32 %v324, %v2104
    %v2106 = vpop.f32.mrb[0].mxu0
    %v2107 = vpop.f32.mrb[0].mxu0
    %v2108 = vadd.f32 %v324, %v2107
    %v2109 = vpop.f32.mrb[0].mxu0
    %2110 = vmatprep.mubr.bf16.mxu0 0
    %2111 = vmatmul.mubr.bf16.gmra.mrb[0].mxu0 %v955
    %v2112 = vpop.f32.mrb[0].mxu0
    %v2113 = vadd.f32 %v324, %v2112
    %v2114 = vpop.f32.mrb[0].mxu0
    %v2115 = vpop.f32.mrb[0].mxu0
    %v2116 = vadd.f32 %v324, %v2115
    %v2117 = vpop.f32.mrb[0].mxu0
    %2118 = vmatprep.mubr.bf16.mxu0 0
    %2119 = vmatmul.mubr.bf16.gmra.mrb[0].mxu0 %v956
    %v2120 = vpop.f32.mrb[0].mxu0
    %v2121 = vadd.f32 %v324, %v2120
    %v2122 = vpop.f32.mrb[0].mxu0
    %v2123 = vpop.f32.mrb[0].mxu0
    %v2124 = vadd.f32 %v324, %v2123
    %v2125 = vpop.f32.mrb[0].mxu0
    %2126 = vmatprep.mubr.bf16.mxu0 0
    %2127 = vmatmul.mubr.bf16.gmra.mrb[0].mxu0 %v957
    %v2128 = vpop.f32.mrb[0].mxu0
    %v2129 = vadd.f32 %v324, %v2128
    %v2130 = vpop.f32.mrb[0].mxu0
    %v2131 = vpop.f32.mrb[0].mxu0
    %v2132 = vadd.f32 %v324, %v2131
    %v2133 = vpop.f32.mrb[0].mxu0
    %2134 = vmatprep.mubr.bf16.mxu0 0
    %2135 = vmatmul.mubr.bf16.gmra.mrb[0].mxu0 %v958
    %v2136 = vpop.f32.mrb[0].mxu0
    %v2137 = vadd.f32 %v324, %v2136
    %v2138 = vpop.f32.mrb[0].mxu0
    %v2139 = vpop.f32.mrb[0].mxu0
    %v2140 = vadd.f32 %v324, %v2139
    %v2141 = vpop.f32.mrb[0].mxu0
    %2142 = vmatprep.mubr.bf16.mxu0 0
    %2143 = vmatmul.mubr.bf16.gmra.mrb[0].mxu0 %v959
    %v2144 = vpop.f32.mrb[0].mxu0
    %v2145 = vadd.f32 %v324, %v2144
    %v2146 = vpop.f32.mrb[0].mxu0
    %v2147 = vpop.f32.mrb[0].mxu0
    %v2148 = vadd.f32 %v324, %v2147
    %v2149 = vpop.f32.mrb[0].mxu0
    %2150 = vmatprep.mubr.bf16.mxu0 0
    %2151 = vmatmul.mubr.bf16.gmra.mrb[0].mxu0 %v960
    %v2152 = vpop.f32.mrb[0].mxu0
    %v2153 = vadd.f32 %v324, %v2152
    %v2154 = vpop.f32.mrb[0].mxu0
    %v2155 = vpop.f32.mrb[0].mxu0
    %v2156 = vadd.f32 %v324, %v2155
    %v2157 = vpop.f32.mrb[0].mxu0
    %2158 = vmatprep.mubr.bf16.mxu0 0
    %2159 = vmatmul.mubr.bf16.gmra.mrb[0].mxu0 %v961
    %v2160 = vpop.f32.mrb[0].mxu0
    %v2161 = vadd.f32 %v324, %v2160
    %v2162 = vpop.f32.mrb[0].mxu0
    %v2163 = vpop.f32.mrb[0].mxu0
    %v2164 = vadd.f32 %v324, %v2163
    %v2165 = vpop.f32.mrb[0].mxu0
    %2166 = vmatprep.mubr.bf16.mxu0 0
    %2167 = vmatmul.mubr.bf16.gmra.mrb[0].mxu0 %v962
    %v2168 = vpop.f32.mrb[0].mxu0
    %v2169 = vadd.f32 %v324, %v2168
    %v2170 = vpop.f32.mrb[0].mxu0
    %v2171 = vpop.f32.mrb[0].mxu0
    %v2172 = vadd.f32 %v324, %v2171
    %v2173 = vpop.f32.mrb[0].mxu0
    %2174 = vmatprep.mubr.bf16.mxu0 0
    %2175 = vmatmul.mubr.bf16.gmra.mrb[0].mxu0 %v963
    %v2176 = vpop.f32.mrb[0].mxu0
    %v2177 = vadd.f32 %v324, %v2176
    %v2178 = vpop.f32.mrb[0].mxu0
    %v2179 = vpop.f32.mrb[0].mxu0
    %v2180 = vadd.f32 %v324, %v2179
    %v2181 = vpop.f32.mrb[0].mxu0
    %2182 = vmatprep.mubr.bf16.mxu0 0
    %2183 = vmatmul.mubr.bf16.gmra.mrb[0].mxu0 %v964
    %v2184 = vpop.f32.mrb[0].mxu0
    %v2185 = vadd.f32 %v324, %v2184
    %v2186 = vpop.f32.mrb[0].mxu0
    %v2187 = vpop.f32.mrb[0].mxu0
    %v2188 = vadd.f32 %v324, %v2187
    %v2189 = vpop.f32.mrb[0].mxu0
    %2190 = vmatprep.mubr.bf16.mxu0 0
    %2191 = vmatmul.mubr.bf16.gmra.mrb[0].mxu0 %v965
    %v2192 = vpop.f32.mrb[0].mxu0
    %v2193 = vadd.f32 %v324, %v2192
    %v2194 = vpop.f32.mrb[0].mxu0
    %v2195 = vpop.f32.mrb[0].mxu0
    %v2196 = vadd.f32 %v324, %v2195
    %v2197 = vpop.f32.mrb[0].mxu0
    %2198 = vdwg.mxu0
    %v2199 = vmax.f32 %v1177, 0.0
    %v2200 = vmax.f32 %v1180, 0.0
    %v2201 = vmax.f32 %v1185, 0.0
    %v2202 = vmax.f32 %v1188, 0.0
    %v2203 = vmax.f32 %v1193, 0.0
    %v2204 = vmax.f32 %v1196, 0.0
    %v2205 = vmax.f32 %v1201, 0.0
    %v2206 = vmax.f32 %v1204, 0.0
    %v2207 = vmax.f32 %v1209, 0.0
    %v2208 = vmax.f32 %v1212, 0.0
    %v2209 = vmax.f32 %v1217, 0.0
    %v2210 = vmax.f32 %v1220, 0.0
    %v2211 = vmax.f32 %v1225, 0.0
    %v2212 = vmax.f32 %v1228, 0.0
    %v2213 = vmax.f32 %v1233, 0.0
    %v2214 = vmax.f32 %v1236, 0.0
    %v2215 = vmax.f32 %v1241, 0.0
    %v2216 = vmax.f32 %v1244, 0.0
    %v2217 = vmax.f32 %v1249, 0.0
    %v2218 = vmax.f32 %v1252, 0.0
    %v2219 = vmax.f32 %v1257, 0.0
    %v2220 = vmax.f32 %v1260, 0.0
    %v2221 = vmax.f32 %v1265, 0.0
    %v2222 = vmax.f32 %v1268, 0.0
    %v2223 = vmax.f32 %v1273, 0.0
    %v2224 = vmax.f32 %v1276, 0.0
    %v2225 = vmax.f32 %v1281, 0.0
    %v2226 = vmax.f32 %v1284, 0.0
    %v2227 = vmax.f32 %v1289, 0.0
    %v2228 = vmax.f32 %v1292, 0.0
    %v2229 = vmax.f32 %v1297, 0.0
    %v2230 = vmax.f32 %v1300, 0.0
    %v2231 = vmax.f32 %v1305, 0.0
    %v2232 = vmax.f32 %v1308, 0.0
    %v2233 = vmax.f32 %v1313, 0.0
    %v2234 = vmax.f32 %v1316, 0.0
    %v2235 = vmax.f32 %v1321, 0.0
    %v2236 = vmax.f32 %v1324, 0.0
    %v2237 = vmax.f32 %v1329, 0.0
    %v2238 = vmax.f32 %v1332, 0.0
    %v2239 = vmax.f32 %v1337, 0.0
    %v2240 = vmax.f32 %v1340, 0.0
    %v2241 = vmax.f32 %v1345, 0.0
    %v2242 = vmax.f32 %v1348, 0.0
    %v2243 = vmax.f32 %v1353, 0.0
    %v2244 = vmax.f32 %v1356, 0.0
    %v2245 = vmax.f32 %v1361, 0.0
    %v2246 = vmax.f32 %v1364, 0.0
    %v2247 = vmax.f32 %v1369, 0.0
    %v2248 = vmax.f32 %v1372, 0.0
    %v2249 = vmax.f32 %v1377, 0.0
    %v2250 = vmax.f32 %v1380, 0.0
    %v2251 = vmax.f32 %v1385, 0.0
    %v2252 = vmax.f32 %v1388, 0.0
    %v2253 = vmax.f32 %v1393, 0.0
    %v2254 = vmax.f32 %v1396, 0.0
    %v2255 = vmax.f32 %v1401, 0.0
    %v2256 = vmax.f32 %v1404, 0.0
    %v2257 = vmax.f32 %v1409, 0.0
    %v2258 = vmax.f32 %v1412, 0.0
    %v2259 = vmax.f32 %v1417, 0.0
    %v2260 = vmax.f32 %v1420, 0.0
    %v2261 = vmax.f32 %v1425, 0.0
    %v2262 = vmax.f32 %v1428, 0.0
    %v2263 = vmax.f32 %v1433, 0.0
    %v2264 = vmax.f32 %v1436, 0.0
    %v2265 = vmax.f32 %v1441, 0.0
    %v2266 = vmax.f32 %v1444, 0.0
    %v2267 = vmax.f32 %v1449, 0.0
    %v2268 = vmax.f32 %v1452, 0.0
    %v2269 = vmax.f32 %v1457, 0.0
    %v2270 = vmax.f32 %v1460, 0.0
    %v2271 = vmax.f32 %v1465, 0.0
    %v2272 = vmax.f32 %v1468, 0.0
    %v2273 = vmax.f32 %v1473, 0.0
    %v2274 = vmax.f32 %v1476, 0.0
    %v2275 = vmax.f32 %v1481, 0.0
    %v2276 = vmax.f32 %v1484, 0.0
    %v2277 = vmax.f32 %v1489, 0.0
    %v2278 = vmax.f32 %v1492, 0.0
    %v2279 = vmax.f32 %v1497, 0.0
    %v2280 = vmax.f32 %v1500, 0.0
    %v2281 = vmax.f32 %v1505, 0.0
    %v2282 = vmax.f32 %v1508, 0.0
    %v2283 = vmax.f32 %v1513, 0.0
    %v2284 = vmax.f32 %v1516, 0.0
    %v2285 = vmax.f32 %v1521, 0.0
    %v2286 = vmax.f32 %v1524, 0.0
    %v2287 = vmax.f32 %v1529, 0.0
    %v2288 = vmax.f32 %v1532, 0.0
    %v2289 = vmax.f32 %v1537, 0.0
    %v2290 = vmax.f32 %v1540, 0.0
    %v2291 = vmax.f32 %v1545, 0.0
    %v2292 = vmax.f32 %v1548, 0.0
    %v2293 = vmax.f32 %v1553, 0.0
    %v2294 = vmax.f32 %v1556, 0.0
    %v2295 = vmax.f32 %v1561, 0.0
    %v2296 = vmax.f32 %v1564, 0.0
    %v2297 = vmax.f32 %v1569, 0.0
    %v2298 = vmax.f32 %v1572, 0.0
    %v2299 = vmax.f32 %v1577, 0.0
    %v2300 = vmax.f32 %v1580, 0.0
    %v2301 = vmax.f32 %v1585, 0.0
    %v2302 = vmax.f32 %v1588, 0.0
    %v2303 = vmax.f32 %v1593, 0.0
    %v2304 = vmax.f32 %v1596, 0.0
    %v2305 = vmax.f32 %v1601, 0.0
    %v2306 = vmax.f32 %v1604, 0.0
    %v2307 = vmax.f32 %v1609, 0.0
    %v2308 = vmax.f32 %v1612, 0.0
    %v2309 = vmax.f32 %v1617, 0.0
    %v2310 = vmax.f32 %v1620, 0.0
    %v2311 = vmax.f32 %v1625, 0.0
    %v2312 = vmax.f32 %v1628, 0.0
    %v2313 = vmax.f32 %v1633, 0.0
    %v2314 = vmax.f32 %v1636, 0.0
    %v2315 = vmax.f32 %v1641, 0.0
    %v2316 = vmax.f32 %v1644, 0.0
    %v2317 = vmax.f32 %v1649, 0.0
    %v2318 = vmax.f32 %v1652, 0.0
    %v2319 = vmax.f32 %v1657, 0.0
    %v2320 = vmax.f32 %v1660, 0.0
    %v2321 = vmax.f32 %v1665, 0.0
    %v2322 = vmax.f32 %v1668, 0.0
    %v2323 = vmax.f32 %v1673, 0.0
    %v2324 = vmax.f32 %v1676, 0.0
    %v2325 = vmax.f32 %v1681, 0.0
    %v2326 = vmax.f32 %v1684, 0.0
    %v2327 = vmax.f32 %v1689, 0.0
    %v2328 = vmax.f32 %v1692, 0.0
    %v2329 = vmax.f32 %v1697, 0.0
    %v2330 = vmax.f32 %v1700, 0.0
    %v2331 = vmax.f32 %v1705, 0.0
    %v2332 = vmax.f32 %v1708, 0.0
    %v2333 = vmax.f32 %v1713, 0.0
    %v2334 = vmax.f32 %v1716, 0.0
    %v2335 = vmax.f32 %v1721, 0.0
    %v2336 = vmax.f32 %v1724, 0.0
    %v2337 = vmax.f32 %v1729, 0.0
    %v2338 = vmax.f32 %v1732, 0.0
    %v2339 = vmax.f32 %v1737, 0.0
    %v2340 = vmax.f32 %v1740, 0.0
    %v2341 = vmax.f32 %v1745, 0.0
    %v2342 = vmax.f32 %v1748, 0.0
    %v2343 = vmax.f32 %v1753, 0.0
    %v2344 = vmax.f32 %v1756, 0.0
    %v2345 = vmax.f32 %v1761, 0.0
    %v2346 = vmax.f32 %v1764, 0.0
    %v2347 = vmax.f32 %v1769, 0.0
    %v2348 = vmax.f32 %v1772, 0.0
    %v2349 = vmax.f32 %v1777, 0.0
    %v2350 = vmax.f32 %v1780, 0.0
    %v2351 = vmax.f32 %v1785, 0.0
    %v2352 = vmax.f32 %v1788, 0.0
    %v2353 = vmax.f32 %v1793, 0.0
    %v2354 = vmax.f32 %v1796, 0.0
    %v2355 = vmax.f32 %v1801, 0.0
    %v2356 = vmax.f32 %v1804, 0.0
    %v2357 = vmax.f32 %v1809, 0.0
    %v2358 = vmax.f32 %v1812, 0.0
    %v2359 = vmax.f32 %v1817, 0.0
    %v2360 = vmax.f32 %v1820, 0.0
    %v2361 = vmax.f32 %v1825, 0.0
    %v2362 = vmax.f32 %v1828, 0.0
    %v2363 = vmax.f32 %v1833, 0.0
    %v2364 = vmax.f32 %v1836, 0.0
    %v2365 = vmax.f32 %v1841, 0.0
    %v2366 = vmax.f32 %v1844, 0.0
    %v2367 = vmax.f32 %v1849, 0.0
    %v2368 = vmax.f32 %v1852, 0.0
    %v2369 = vmax.f32 %v1857, 0.0
    %v2370 = vmax.f32 %v1860, 0.0
    %v2371 = vmax.f32 %v1865, 0.0
    %v2372 = vmax.f32 %v1868, 0.0
    %v2373 = vmax.f32 %v1873, 0.0
    %v2374 = vmax.f32 %v1876, 0.0
    %v2375 = vmax.f32 %v1881, 0.0
    %v2376 = vmax.f32 %v1884, 0.0
    %v2377 = vmax.f32 %v1889, 0.0
    %v2378 = vmax.f32 %v1892, 0.0
    %v2379 = vmax.f32 %v1897, 0.0
    %v2380 = vmax.f32 %v1900, 0.0
    %v2381 = vmax.f32 %v1905, 0.0
    %v2382 = vmax.f32 %v1908, 0.0
    %v2383 = vmax.f32 %v1913, 0.0
    %v2384 = vmax.f32 %v1916, 0.0
    %v2385 = vmax.f32 %v1921, 0.0
    %v2386 = vmax.f32 %v1924, 0.0
    %v2387 = vmax.f32 %v1929, 0.0
    %v2388 = vmax.f32 %v1932, 0.0
    %v2389 = vmax.f32 %v1937, 0.0
    %v2390 = vmax.f32 %v1940, 0.0
    %v2391 = vmax.f32 %v1945, 0.0
    %v2392 = vmax.f32 %v1948, 0.0
    %v2393 = vmax.f32 %v1953, 0.0
    %v2394 = vmax.f32 %v1956, 0.0
    %v2395 = vmax.f32 %v1961, 0.0
    %v2396 = vmax.f32 %v1964, 0.0
    %v2397 = vmax.f32 %v1969, 0.0
    %v2398 = vmax.f32 %v1972, 0.0
    %v2399 = vmax.f32 %v1977, 0.0
    %v2400 = vmax.f32 %v1980, 0.0
    %v2401 = vmax.f32 %v1985, 0.0
    %v2402 = vmax.f32 %v1988, 0.0
    %v2403 = vmax.f32 %v1993, 0.0
    %v2404 = vmax.f32 %v1996, 0.0
    %v2405 = vmax.f32 %v2001, 0.0
    %v2406 = vmax.f32 %v2004, 0.0
    %v2407 = vmax.f32 %v2009, 0.0
    %v2408 = vmax.f32 %v2012, 0.0
    %v2409 = vmax.f32 %v2017, 0.0
    %v2410 = vmax.f32 %v2020, 0.0
    %v2411 = vmax.f32 %v2025, 0.0
    %v2412 = vmax.f32 %v2028, 0.0
    %v2413 = vmax.f32 %v2033, 0.0
    %v2414 = vmax.f32 %v2036, 0.0
    %v2415 = vmax.f32 %v2041, 0.0
    %v2416 = vmax.f32 %v2044, 0.0
    %v2417 = vmax.f32 %v2049, 0.0
    %v2418 = vmax.f32 %v2052, 0.0
    %v2419 = vmax.f32 %v2057, 0.0
    %v2420 = vmax.f32 %v2060, 0.0
    %v2421 = vmax.f32 %v2065, 0.0
    %v2422 = vmax.f32 %v2068, 0.0
    %v2423 = vmax.f32 %v2073, 0.0
    %v2424 = vmax.f32 %v2076, 0.0
    %v2425 = vmax.f32 %v2081, 0.0
    %v2426 = vmax.f32 %v2084, 0.0
    %v2427 = vmax.f32 %v2089, 0.0
    %v2428 = vmax.f32 %v2092, 0.0
    %v2429 = vmax.f32 %v2097, 0.0
    %v2430 = vmax.f32 %v2100, 0.0
    %v2431 = vmax.f32 %v2105, 0.0
    %v2432 = vmax.f32 %v2108, 0.0
    %v2433 = vmax.f32 %v2113, 0.0
    %v2434 = vmax.f32 %v2116, 0.0
    %v2435 = vmax.f32 %v2121, 0.0
    %v2436 = vmax.f32 %v2124, 0.0
    %v2437 = vmax.f32 %v2129, 0.0
    %v2438 = vmax.f32 %v2132, 0.0
    %v2439 = vmax.f32 %v2137, 0.0
    %v2440 = vmax.f32 %v2140, 0.0
    %v2441 = vmax.f32 %v2145, 0.0
    %v2442 = vmax.f32 %v2148, 0.0
    %v2443 = vmax.f32 %v2153, 0.0
    %v2444 = vmax.f32 %v2156, 0.0
    %v2445 = vmax.f32 %v2161, 0.0
    %v2446 = vmax.f32 %v2164, 0.0
    %v2447 = vmax.f32 %v2169, 0.0
    %v2448 = vmax.f32 %v2172, 0.0
    %v2449 = vmax.f32 %v2177, 0.0
    %v2450 = vmax.f32 %v2180, 0.0
    %v2451 = vmax.f32 %v2185, 0.0
    %v2452 = vmax.f32 %v2188, 0.0
    %v2453 = vmax.f32 %v2193, 0.0
    %v2454 = vmax.f32 %v2196, 0.0
    %v2455 = vadd.f32 %v2199, %v2200
    %v2456 = vadd.f32 %v2455, %v2201
    %v2457 = vadd.f32 %v2456, %v2202
    %v2458 = vadd.f32 %v2457, %v2203
    %v2459 = vadd.f32 %v2458, %v2204
    %v2460 = vadd.f32 %v2459, %v2205
    %v2461 = vadd.f32 %v2460, %v2206
    %v2462 = vadd.f32 %v2461, %v2207
    %v2463 = vadd.f32 %v2462, %v2208
    %v2464 = vadd.f32 %v2463, %v2209
    %v2465 = vadd.f32 %v2464, %v2210
    %v2466 = vadd.f32 %v2465, %v2211
    %v2467 = vadd.f32 %v2466, %v2212
    %v2468 = vadd.f32 %v2467, %v2213
    %v2469 = vadd.f32 %v2468, %v2214
    %v2470 = vadd.f32 %v2469, %v2215
    %v2471 = vadd.f32 %v2470, %v2216
    %v2472 = vadd.f32 %v2471, %v2217
    %v2473 = vadd.f32 %v2472, %v2218
    %v2474 = vadd.f32 %v2473, %v2219
    %v2475 = vadd.f32 %v2474, %v2220
    %v2476 = vadd.f32 %v2475, %v2221
    %v2477 = vadd.f32 %v2476, %v2222
    %v2478 = vadd.f32 %v2477, %v2223
    %v2479 = vadd.f32 %v2478, %v2224
    %v2480 = vadd.f32 %v2479, %v2225
    %v2481 = vadd.f32 %v2480, %v2226
    %v2482 = vadd.f32 %v2481, %v2227
    %v2483 = vadd.f32 %v2482, %v2228
    %v2484 = vadd.f32 %v2483, %v2229
    %v2485 = vadd.f32 %v2484, %v2230
    %v2486 = vrot.slane %v2485, 4
    %v2487 = vadd.f32 %v2485, %v2486
    %v2488 = vrot.slane %v2487, 2
    %v2489 = vadd.f32 %v2487, %v2488
    %v2490 = vrot.slane %v2489, 1
    %v2491 = vadd.f32 %v2489, %v2490
    %v2492 = vadd.f32 %v2231, %v2232
    %v2493 = vadd.f32 %v2492, %v2233
    %v2494 = vadd.f32 %v2493, %v2234
    %v2495 = vadd.f32 %v2494, %v2235
    %v2496 = vadd.f32 %v2495, %v2236
    %v2497 = vadd.f32 %v2496, %v2237
    %v2498 = vadd.f32 %v2497, %v2238
    %v2499 = vadd.f32 %v2498, %v2239
    %v2500 = vadd.f32 %v2499, %v2240
    %v2501 = vadd.f32 %v2500, %v2241
    %v2502 = vadd.f32 %v2501, %v2242
    %v2503 = vadd.f32 %v2502, %v2243
    %v2504 = vadd.f32 %v2503, %v2244
    %v2505 = vadd.f32 %v2504, %v2245
    %v2506 = vadd.f32 %v2505, %v2246
    %v2507 = vadd.f32 %v2506, %v2247
    %v2508 = vadd.f32 %v2507, %v2248
    %v2509 = vadd.f32 %v2508, %v2249
    %v2510 = vadd.f32 %v2509, %v2250
    %v2511 = vadd.f32 %v2510, %v2251
    %v2512 = vadd.f32 %v2511, %v2252
    %v2513 = vadd.f32 %v2512, %v2253
    %v2514 = vadd.f32 %v2513, %v2254
    %v2515 = vadd.f32 %v2514, %v2255
    %v2516 = vadd.f32 %v2515, %v2256
    %v2517 = vadd.f32 %v2516, %v2257
    %v2518 = vadd.f32 %v2517, %v2258
    %v2519 = vadd.f32 %v2518, %v2259
    %v2520 = vadd.f32 %v2519, %v2260
    %v2521 = vadd.f32 %v2520, %v2261
    %v2522 = vadd.f32 %v2521, %v2262
    %v2523 = vrot.slane %v2522, 4
    %v2524 = vadd.f32 %v2522, %v2523
    %v2525 = vrot.slane %v2524, 2
    %v2526 = vadd.f32 %v2524, %v2525
    %v2527 = vrot.slane %v2526, 1
    %v2528 = vadd.f32 %v2526, %v2527
    %v2529 = vadd.f32 %v2263, %v2264
    %v2530 = vadd.f32 %v2529, %v2265
    %v2531 = vadd.f32 %v2530, %v2266
    %v2532 = vadd.f32 %v2531, %v2267
    %v2533 = vadd.f32 %v2532, %v2268
    %v2534 = vadd.f32 %v2533, %v2269
    %v2535 = vadd.f32 %v2534, %v2270
    %v2536 = vadd.f32 %v2535, %v2271
    %v2537 = vadd.f32 %v2536, %v2272
    %v2538 = vadd.f32 %v2537, %v2273
    %v2539 = vadd.f32 %v2538, %v2274
    %v2540 = vadd.f32 %v2539, %v2275
    %v2541 = vadd.f32 %v2540, %v2276
    %v2542 = vadd.f32 %v2541, %v2277
    %v2543 = vadd.f32 %v2542, %v2278
    %v2544 = vadd.f32 %v2543, %v2279
    %v2545 = vadd.f32 %v2544, %v2280
    %v2546 = vadd.f32 %v2545, %v2281
    %v2547 = vadd.f32 %v2546, %v2282
    %v2548 = vadd.f32 %v2547, %v2283
    %v2549 = vadd.f32 %v2548, %v2284
    %v2550 = vadd.f32 %v2549, %v2285
    %v2551 = vadd.f32 %v2550, %v2286
    %v2552 = vadd.f32 %v2551, %v2287
    %v2553 = vadd.f32 %v2552, %v2288
    %v2554 = vadd.f32 %v2553, %v2289
    %v2555 = vadd.f32 %v2554, %v2290
    %v2556 = vadd.f32 %v2555, %v2291
    %v2557 = vadd.f32 %v2556, %v2292
    %v2558 = vadd.f32 %v2557, %v2293
    %v2559 = vadd.f32 %v2558, %v2294
    %v2560 = vrot.slane %v2559, 4
    %v2561 = vadd.f32 %v2559, %v2560
    %v2562 = vrot.slane %v2561, 2
    %v2563 = vadd.f32 %v2561, %v2562
    %v2564 = vrot.slane %v2563, 1
    %v2565 = vadd.f32 %v2563, %v2564
    %v2566 = vadd.f32 %v2295, %v2296
    %v2567 = vadd.f32 %v2566, %v2297
    %v2568 = vadd.f32 %v2567, %v2298
    %v2569 = vadd.f32 %v2568, %v2299
    %v2570 = vadd.f32 %v2569, %v2300
    %v2571 = vadd.f32 %v2570, %v2301
    %v2572 = vadd.f32 %v2571, %v2302
    %v2573 = vadd.f32 %v2572, %v2303
    %v2574 = vadd.f32 %v2573, %v2304
    %v2575 = vadd.f32 %v2574, %v2305
    %v2576 = vadd.f32 %v2575, %v2306
    %v2577 = vadd.f32 %v2576, %v2307
    %v2578 = vadd.f32 %v2577, %v2308
    %v2579 = vadd.f32 %v2578, %v2309
    %v2580 = vadd.f32 %v2579, %v2310
    %v2581 = vadd.f32 %v2580, %v2311
    %v2582 = vadd.f32 %v2581, %v2312
    %v2583 = vadd.f32 %v2582, %v2313
    %v2584 = vadd.f32 %v2583, %v2314
    %v2585 = vadd.f32 %v2584, %v2315
    %v2586 = vadd.f32 %v2585, %v2316
    %v2587 = vadd.f32 %v2586, %v2317
    %v2588 = vadd.f32 %v2587, %v2318
    %v2589 = vadd.f32 %v2588, %v2319
    %v2590 = vadd.f32 %v2589, %v2320
    %v2591 = vadd.f32 %v2590, %v2321
    %v2592 = vadd.f32 %v2591, %v2322
    %v2593 = vadd.f32 %v2592, %v2323
    %v2594 = vadd.f32 %v2593, %v2324
    %v2595 = vadd.f32 %v2594, %v2325
    %v2596 = vadd.f32 %v2595, %v2326
    %v2597 = vrot.slane %v2596, 4
    %v2598 = vadd.f32 %v2596, %v2597
    %v2599 = vrot.slane %v2598, 2
    %v2600 = vadd.f32 %v2598, %v2599
    %v2601 = vrot.slane %v2600, 1
    %v2602 = vadd.f32 %v2600, %v2601
    %v2603 = vadd.f32 %v2327, %v2328
    %v2604 = vadd.f32 %v2603, %v2329
    %v2605 = vadd.f32 %v2604, %v2330
    %v2606 = vadd.f32 %v2605, %v2331
    %v2607 = vadd.f32 %v2606, %v2332
    %v2608 = vadd.f32 %v2607, %v2333
    %v2609 = vadd.f32 %v2608, %v2334
    %v2610 = vadd.f32 %v2609, %v2335
    %v2611 = vadd.f32 %v2610, %v2336
    %v2612 = vadd.f32 %v2611, %v2337
    %v2613 = vadd.f32 %v2612, %v2338
    %v2614 = vadd.f32 %v2613, %v2339
    %v2615 = vadd.f32 %v2614, %v2340
    %v2616 = vadd.f32 %v2615, %v2341
    %v2617 = vadd.f32 %v2616, %v2342
    %v2618 = vadd.f32 %v2617, %v2343
    %v2619 = vadd.f32 %v2618, %v2344
    %v2620 = vadd.f32 %v2619, %v2345
    %v2621 = vadd.f32 %v2620, %v2346
    %v2622 = vadd.f32 %v2621, %v2347
    %v2623 = vadd.f32 %v2622, %v2348
    %v2624 = vadd.f32 %v2623, %v2349
    %v2625 = vadd.f32 %v2624, %v2350
    %v2626 = vadd.f32 %v2625, %v2351
    %v2627 = vadd.f32 %v2626, %v2352
    %v2628 = vadd.f32 %v2627, %v2353
    %v2629 = vadd.f32 %v2628, %v2354
    %v2630 = vadd.f32 %v2629, %v2355
    %v2631 = vadd.f32 %v2630, %v2356
    %v2632 = vadd.f32 %v2631, %v2357
    %v2633 = vadd.f32 %v2632, %v2358
    %v2634 = vrot.slane %v2633, 4
    %v2635 = vadd.f32 %v2633, %v2634
    %v2636 = vrot.slane %v2635, 2
    %v2637 = vadd.f32 %v2635, %v2636
    %v2638 = vrot.slane %v2637, 1
    %v2639 = vadd.f32 %v2637, %v2638
    %v2640 = vadd.f32 %v2359, %v2360
    %v2641 = vadd.f32 %v2640, %v2361
    %v2642 = vadd.f32 %v2641, %v2362
    %v2643 = vadd.f32 %v2642, %v2363
    %v2644 = vadd.f32 %v2643, %v2364
    %v2645 = vadd.f32 %v2644, %v2365
    %v2646 = vadd.f32 %v2645, %v2366
    %v2647 = vadd.f32 %v2646, %v2367
    %v2648 = vadd.f32 %v2647, %v2368
    %v2649 = vadd.f32 %v2648, %v2369
    %v2650 = vadd.f32 %v2649, %v2370
    %v2651 = vadd.f32 %v2650, %v2371
    %v2652 = vadd.f32 %v2651, %v2372
    %v2653 = vadd.f32 %v2652, %v2373
    %v2654 = vadd.f32 %v2653, %v2374
    %v2655 = vadd.f32 %v2654, %v2375
    %v2656 = vadd.f32 %v2655, %v2376
    %v2657 = vadd.f32 %v2656, %v2377
    %v2658 = vadd.f32 %v2657, %v2378
    %v2659 = vadd.f32 %v2658, %v2379
    %v2660 = vadd.f32 %v2659, %v2380
    %v2661 = vadd.f32 %v2660, %v2381
    %v2662 = vadd.f32 %v2661, %v2382
    %v2663 = vadd.f32 %v2662, %v2383
    %v2664 = vadd.f32 %v2663, %v2384
    %v2665 = vadd.f32 %v2664, %v2385
    %v2666 = vadd.f32 %v2665, %v2386
    %v2667 = vadd.f32 %v2666, %v2387
    %v2668 = vadd.f32 %v2667, %v2388
    %v2669 = vadd.f32 %v2668, %v2389
    %v2670 = vadd.f32 %v2669, %v2390
    %v2671 = vrot.slane %v2670, 4
    %v2672 = vadd.f32 %v2670, %v2671
    %v2673 = vrot.slane %v2672, 2
    %v2674 = vadd.f32 %v2672, %v2673
    %v2675 = vrot.slane %v2674, 1
    %v2676 = vadd.f32 %v2674, %v2675
    %v2677 = vadd.f32 %v2391, %v2392
    %v2678 = vadd.f32 %v2677, %v2393
    %v2679 = vadd.f32 %v2678, %v2394
    %v2680 = vadd.f32 %v2679, %v2395
    %v2681 = vadd.f32 %v2680, %v2396
    %v2682 = vadd.f32 %v2681, %v2397
    %v2683 = vadd.f32 %v2682, %v2398
    %v2684 = vadd.f32 %v2683, %v2399
    %v2685 = vadd.f32 %v2684, %v2400
    %v2686 = vadd.f32 %v2685, %v2401
    %v2687 = vadd.f32 %v2686, %v2402
    %v2688 = vadd.f32 %v2687, %v2403
    %v2689 = vadd.f32 %v2688, %v2404
    %v2690 = vadd.f32 %v2689, %v2405
    %v2691 = vadd.f32 %v2690, %v2406
    %v2692 = vadd.f32 %v2691, %v2407
    %v2693 = vadd.f32 %v2692, %v2408
    %v2694 = vadd.f32 %v2693, %v2409
    %v2695 = vadd.f32 %v2694, %v2410
    %v2696 = vadd.f32 %v2695, %v2411
    %v2697 = vadd.f32 %v2696, %v2412
    %v2698 = vadd.f32 %v2697, %v2413
    %v2699 = vadd.f32 %v2698, %v2414
    %v2700 = vadd.f32 %v2699, %v2415
    %v2701 = vadd.f32 %v2700, %v2416
    %v2702 = vadd.f32 %v2701, %v2417
    %v2703 = vadd.f32 %v2702, %v2418
    %v2704 = vadd.f32 %v2703, %v2419
    %v2705 = vadd.f32 %v2704, %v2420
    %v2706 = vadd.f32 %v2705, %v2421
    %v2707 = vadd.f32 %v2706, %v2422
    %v2708 = vrot.slane %v2707, 4
    %v2709 = vadd.f32 %v2707, %v2708
    %v2710 = vrot.slane %v2709, 2
    %v2711 = vadd.f32 %v2709, %v2710
    %v2712 = vrot.slane %v2711, 1
    %v2713 = vadd.f32 %v2711, %v2712
    %v2714 = vadd.f32 %v2423, %v2424
    %v2715 = vadd.f32 %v2714, %v2425
    %v2716 = vadd.f32 %v2715, %v2426
    %v2717 = vadd.f32 %v2716, %v2427
    %v2718 = vadd.f32 %v2717, %v2428
    %v2719 = vadd.f32 %v2718, %v2429
    %v2720 = vadd.f32 %v2719, %v2430
    %v2721 = vadd.f32 %v2720, %v2431
    %v2722 = vadd.f32 %v2721, %v2432
    %v2723 = vadd.f32 %v2722, %v2433
    %v2724 = vadd.f32 %v2723, %v2434
    %v2725 = vadd.f32 %v2724, %v2435
    %v2726 = vadd.f32 %v2725, %v2436
    %v2727 = vadd.f32 %v2726, %v2437
    %v2728 = vadd.f32 %v2727, %v2438
    %v2729 = vadd.f32 %v2728, %v2439
    %v2730 = vadd.f32 %v2729, %v2440
    %v2731 = vadd.f32 %v2730, %v2441
    %v2732 = vadd.f32 %v2731, %v2442
    %v2733 = vadd.f32 %v2732, %v2443
    %v2734 = vadd.f32 %v2733, %v2444
    %v2735 = vadd.f32 %v2734, %v2445
    %v2736 = vadd.f32 %v2735, %v2446
    %v2737 = vadd.f32 %v2736, %v2447
    %v2738 = vadd.f32 %v2737, %v2448
    %v2739 = vadd.f32 %v2738, %v2449
    %v2740 = vadd.f32 %v2739, %v2450
    %v2741 = vadd.f32 %v2740, %v2451
    %v2742 = vadd.f32 %v2741, %v2452
    %v2743 = vadd.f32 %v2742, %v2453
    %v2744 = vadd.f32 %v2743, %v2454
    %v2745 = vrot.slane %v2744, 4
    %v2746 = vadd.f32 %v2744, %v2745
    %v2747 = vrot.slane %v2746, 2
    %v2748 = vadd.f32 %v2746, %v2747
    %v2749 = vrot.slane %v2748, 1
    %v2750 = vadd.f32 %v2748, %v2749
    %v2751 = vld [vmem:[%s3] sm:$0xff]
    %v2752 = vld [vmem:[%s3 + $0x8] sm:$0xff]
    %v2753 = vld [vmem:[%s3 + $0x10] sm:$0xff]
    %v2754 = vld [vmem:[%s3 + $0x18] sm:$0xff]
    %v2755 = vld [vmem:[%s3 + $0x20] sm:$0xff]
    %v2756 = vld [vmem:[%s3 + $0x28] sm:$0xff]
    %v2757 = vld [vmem:[%s3 + $0x30] sm:$0xff]
    %v2758 = vld [vmem:[%s3 + $0x38] sm:$0xff]
    %v2759 = vld [vmem:[%s3 + $0x40] sm:$0xff]
    %v2760 = vld [vmem:[%s3 + $0x48] sm:$0xff]
    %v2761 = vld [vmem:[%s3 + $0x50] sm:$0xff]
    %v2762 = vld [vmem:[%s3 + $0x58] sm:$0xff]
    %v2763 = vld [vmem:[%s3 + $0x60] sm:$0xff]
    %v2764 = vld [vmem:[%s3 + $0x68] sm:$0xff]
    %v2765 = vld [vmem:[%s3 + $0x70] sm:$0xff]
    %v2766 = vld [vmem:[%s3 + $0x78] sm:$0xff]
    %v2767 = vld [vmem:[%s4] sm:$0x1]
    %v2769 = vlaneseq
    %v2770 = vshrl.u32 %v2769, 7
    %v2771 = vsub.s32 0, %v2770
    %v2772 = vrot.slane %v2767, %v2771
    %vm2782 = vcmask 1041409
    %v2783 = vsel %vm2782, %v2528, %v2491
    %vm2784 = vcmask 1042434
    %v2785 = vsel %vm2784, %v2565, %v2783
    %vm2786 = vcmask 1043459
    %v2787 = vsel %vm2786, %v2602, %v2785
    %vm2788 = vcmask 1044484
    %v2789 = vsel %vm2788, %v2639, %v2787
    %vm2790 = vcmask 1045509
    %v2791 = vsel %vm2790, %v2676, %v2789
    %vm2792 = vcmask 1046534
    %v2793 = vsel %vm2792, %v2713, %v2791
    %vm2794 = vcmask 1047559
    %v2795 = vsel %vm2794, %v2750, %v2793
    %2797 = vmatprep.subr.mxu0 0.0
    %2798 = vmatpush1.msra.mxu0 %v2751
    %2799 = vmatprep.subr.mxu0 0.0
    %2800 = vmatpush1.msra.mxu0 %v2752
    %2801 = vmatprep.subr.mxu0 0.0
    %2802 = vmatpush1.msra.mxu0 %v2753
    %2803 = vmatprep.subr.mxu0 0.0
    %2804 = vmatpush1.msra.mxu0 %v2754
    %2805 = vmatprep.subr.mxu0 0.0
    %2806 = vmatpush1.msra.mxu0 %v2755
    %2807 = vmatprep.subr.mxu0 0.0
    %2808 = vmatpush1.msra.mxu0 %v2756
    %2809 = vmatprep.subr.mxu0 0.0
    %2810 = vmatpush1.msra.mxu0 %v2757
    %2811 = vmatprep.subr.mxu0 0.0
    %2812 = vmatpush1.msra.mxu0 %v2758
    %2813 = vmatprep.subr.mxu0 0.0
    %2814 = vmatpush1.msra.mxu0 %v2759
    %2815 = vmatprep.subr.mxu0 0.0
    %2816 = vmatpush1.msra.mxu0 %v2760
    %2817 = vmatprep.subr.mxu0 0.0
    %2818 = vmatpush1.msra.mxu0 %v2761
    %2819 = vmatprep.subr.mxu0 0.0
    %2820 = vmatpush1.msra.mxu0 %v2762
    %2821 = vmatprep.subr.mxu0 0.0
    %2822 = vmatpush1.msra.mxu0 %v2763
    %2823 = vmatprep.subr.mxu0 0.0
    %2824 = vmatpush1.msra.mxu0 %v2764
    %2825 = vmatprep.subr.mxu0 0.0
    %2826 = vmatpush1.msra.mxu0 %v2765
    %2827 = vmatprep.subr.mxu0 0.0
    %2828 = vmatpush1.msra.mxu0 %v2766
    %2829 = vmatprep.subr.mxu0 0.0
    %2830 = vmatpush1.msra.mxu0 0.0
    %2831 = vmatprep.subr.mxu0 0.0
    %2832 = vmatpush1.msra.mxu0 0.0
    %2833 = vmatprep.subr.mxu0 0.0
    %2834 = vmatpush1.msra.mxu0 0.0
    %2835 = vmatprep.subr.mxu0 0.0
    %2836 = vmatpush1.msra.mxu0 0.0
    %2837 = vmatprep.subr.mxu0 0.0
    %2838 = vmatpush1.msra.mxu0 0.0
    %2839 = vmatprep.subr.mxu0 0.0
    %2840 = vmatpush1.msra.mxu0 0.0
    %2841 = vmatprep.subr.mxu0 0.0
    %2842 = vmatpush1.msra.mxu0 0.0
    %2843 = vmatprep.subr.mxu0 0.0
    %2844 = vmatpush1.msra.mxu0 0.0
    %2845 = vmatprep.subr.mxu0 0.0
    %2846 = vmatpush1.msra.mxu0 0.0
    %2847 = vmatprep.subr.mxu0 0.0
    %2848 = vmatpush1.msra.mxu0 0.0
    %2849 = vmatprep.subr.mxu0 0.0
    %2850 = vmatpush1.msra.mxu0 0.0
    %2851 = vmatprep.subr.mxu0 0.0
    %2852 = vmatpush1.msra.mxu0 0.0
    %2853 = vmatprep.subr.mxu0 0.0
    %2854 = vmatpush1.msra.mxu0 0.0
    %2855 = vmatprep.subr.mxu0 0.0
    %2856 = vmatpush1.msra.mxu0 0.0
    %2857 = vmatprep.subr.mxu0 0.0
    %2858 = vmatpush1.msra.mxu0 0.0
    %2859 = vmatprep.subr.mxu0 0.0
    %2860 = vmatpush1.msra.mxu0 0.0
    %2861 = vmatprep.mubr.f32.mxu0 0.0
    %2862 = vmatmul.mubr.f32.gmra.mrb[0].mxu0 %v2795
    %v2863 = vpop.f32.mrb[0].mxu0
    %v2864 = vadd.f32 %v2772, %v2863
    %v2865 = vpop.f32.mrb[0].mxu0
    %2866 = vdwg.mxu0
    %v2867 = vld [vmem:[%s5] sm:$0xf]
    %v2868 = vld [vmem:[%s6] sm:$0x1]
    %v2870 = vlaneseq
    %v2871 = vshrl.u32 %v2870, 7
    %v2872 = vsub.s32 0, %v2871
    %v2873 = vrot.slane %v2868, %v2872
    %vm2875 = vcmask 31744
    %v2877 = vsel %vm2875, %v2864, 0
    %vm2879 = vcmask 1043456
    %v2881 = vsel %vm2879, %v2867, 0
    %2883 = vmatprep.subr.mxu0 0.0
    %2884 = vmatpush1.msra.mxu0 %v2881
    %2885 = vmatprep.subr.mxu0 0.0
    %2886 = vmatpush1.msra.mxu0 0.0
    %2887 = vmatprep.subr.mxu0 0.0
    %2888 = vmatpush1.msra.mxu0 0.0
    %2889 = vmatprep.subr.mxu0 0.0
    %2890 = vmatpush1.msra.mxu0 0.0
    %2891 = vmatprep.subr.mxu0 0.0
    %2892 = vmatpush1.msra.mxu0 0.0
    %2893 = vmatprep.subr.mxu0 0.0
    %2894 = vmatpush1.msra.mxu0 0.0
    %2895 = vmatprep.subr.mxu0 0.0
    %2896 = vmatpush1.msra.mxu0 0.0
    %2897 = vmatprep.subr.mxu0 0.0
    %2898 = vmatpush1.msra.mxu0 0.0
    %2899 = vmatprep.subr.mxu0 0.0
    %2900 = vmatpush1.msra.mxu0 0.0
    %2901 = vmatprep.subr.mxu0 0.0
    %2902 = vmatpush1.msra.mxu0 0.0
    %2903 = vmatprep.subr.mxu0 0.0
    %2904 = vmatpush1.msra.mxu0 0.0
    %2905 = vmatprep.subr.mxu0 0.0
    %2906 = vmatpush1.msra.mxu0 0.0
    %2907 = vmatprep.subr.mxu0 0.0
    %2908 = vmatpush1.msra.mxu0 0.0
    %2909 = vmatprep.subr.mxu0 0.0
    %2910 = vmatpush1.msra.mxu0 0.0
    %2911 = vmatprep.subr.mxu0 0.0
    %2912 = vmatpush1.msra.mxu0 0.0
    %2913 = vmatprep.subr.mxu0 0.0
    %2914 = vmatpush1.msra.mxu0 0.0
    %2915 = vmatprep.subr.mxu0 0.0
    %2916 = vmatpush1.msra.mxu0 0.0
    %2917 = vmatprep.subr.mxu0 0.0
    %2918 = vmatpush1.msra.mxu0 0.0
    %2919 = vmatprep.subr.mxu0 0.0
    %2920 = vmatpush1.msra.mxu0 0.0
    %2921 = vmatprep.subr.mxu0 0.0
    %2922 = vmatpush1.msra.mxu0 0.0
    %2923 = vmatprep.subr.mxu0 0.0
    %2924 = vmatpush1.msra.mxu0 0.0
    %2925 = vmatprep.subr.mxu0 0.0
    %2926 = vmatpush1.msra.mxu0 0.0
    %2927 = vmatprep.subr.mxu0 0.0
    %2928 = vmatpush1.msra.mxu0 0.0
    %2929 = vmatprep.subr.mxu0 0.0
    %2930 = vmatpush1.msra.mxu0 0.0
    %2931 = vmatprep.subr.mxu0 0.0
    %2932 = vmatpush1.msra.mxu0 0.0
    %2933 = vmatprep.subr.mxu0 0.0
    %2934 = vmatpush1.msra.mxu0 0.0
    %2935 = vmatprep.subr.mxu0 0.0
    %2936 = vmatpush1.msra.mxu0 0.0
    %2937 = vmatprep.subr.mxu0 0.0
    %2938 = vmatpush1.msra.mxu0 0.0
    %2939 = vmatprep.subr.mxu0 0.0
    %2940 = vmatpush1.msra.mxu0 0.0
    %2941 = vmatprep.subr.mxu0 0.0
    %2942 = vmatpush1.msra.mxu0 0.0
    %2943 = vmatprep.subr.mxu0 0.0
    %2944 = vmatpush1.msra.mxu0 0.0
    %2945 = vmatprep.subr.mxu0 0.0
    %2946 = vmatpush1.msra.mxu0 0.0
    %2947 = vmatprep.mubr.f32.mxu0 0.0
    %2948 = vmatmul.mubr.f32.gmra.mrb[0].mxu0 %v2877
    %v2949 = vpop.f32.mrb[0].mxu0
    %v2950 = vadd.f32 %v2873, %v2949
    %v2951 = vpop.f32.mrb[0].mxu0
    %2952 = vdwg.mxu0
    %v2953 = vmax.f32 %v2950, 0.0
    %v2954 = vld [vmem:[%s7] sm:$0xff]
    %v2955 = vld [vmem:[%s7 + $0x8] sm:$0xff]
    %v2956 = vld [vmem:[%s8] sm:$0x1]
    %v2958 = vlaneseq
    %v2959 = vshrl.u32 %v2958, 7
    %v2960 = vsub.s32 0, %v2959
    %v2961 = vrot.slane %v2956, %v2960
    %vm2963 = vcmask 130048
    %v2965 = vsel %vm2963, %v2953, 0
    %2967 = vmatprep.subr.mxu0 0.0
    %2968 = vmatpush1.msra.mxu0 %v2954
    %2969 = vmatprep.subr.mxu0 0.0
    %2970 = vmatpush1.msra.mxu0 %v2955
    %2971 = vmatprep.subr.mxu0 0.0
    %2972 = vmatpush1.msra.mxu0 0.0
    %2973 = vmatprep.subr.mxu0 0.0
    %2974 = vmatpush1.msra.mxu0 0.0
    %2975 = vmatprep.subr.mxu0 0.0
    %2976 = vmatpush1.msra.mxu0 0.0
    %2977 = vmatprep.subr.mxu0 0.0
    %2978 = vmatpush1.msra.mxu0 0.0
    %2979 = vmatprep.subr.mxu0 0.0
    %2980 = vmatpush1.msra.mxu0 0.0
    %2981 = vmatprep.subr.mxu0 0.0
    %2982 = vmatpush1.msra.mxu0 0.0
    %2983 = vmatprep.subr.mxu0 0.0
    %2984 = vmatpush1.msra.mxu0 0.0
    %2985 = vmatprep.subr.mxu0 0.0
    %2986 = vmatpush1.msra.mxu0 0.0
    %2987 = vmatprep.subr.mxu0 0.0
    %2988 = vmatpush1.msra.mxu0 0.0
    %2989 = vmatprep.subr.mxu0 0.0
    %2990 = vmatpush1.msra.mxu0 0.0
    %2991 = vmatprep.subr.mxu0 0.0
    %2992 = vmatpush1.msra.mxu0 0.0
    %2993 = vmatprep.subr.mxu0 0.0
    %2994 = vmatpush1.msra.mxu0 0.0
    %2995 = vmatprep.subr.mxu0 0.0
    %2996 = vmatpush1.msra.mxu0 0.0
    %2997 = vmatprep.subr.mxu0 0.0
    %2998 = vmatpush1.msra.mxu0 0.0
    %2999 = vmatprep.subr.mxu0 0.0
    %3000 = vmatpush1.msra.mxu0 0.0
    %3001 = vmatprep.subr.mxu0 0.0
    %3002 = vmatpush1.msra.mxu0 0.0
    %3003 = vmatprep.subr.mxu0 0.0
    %3004 = vmatpush1.msra.mxu0 0.0
    %3005 = vmatprep.subr.mxu0 0.0
    %3006 = vmatpush1.msra.mxu0 0.0
    %3007 = vmatprep.subr.mxu0 0.0
    %3008 = vmatpush1.msra.mxu0 0.0
    %3009 = vmatprep.subr.mxu0 0.0
    %3010 = vmatpush1.msra.mxu0 0.0
    %3011 = vmatprep.subr.mxu0 0.0
    %3012 = vmatpush1.msra.mxu0 0.0
    %3013 = vmatprep.subr.mxu0 0.0
    %3014 = vmatpush1.msra.mxu0 0.0
    %3015 = vmatprep.subr.mxu0 0.0
    %3016 = vmatpush1.msra.mxu0 0.0
    %3017 = vmatprep.subr.mxu0 0.0
    %3018 = vmatpush1.msra.mxu0 0.0
    %3019 = vmatprep.subr.mxu0 0.0
    %3020 = vmatpush1.msra.mxu0 0.0
    %3021 = vmatprep.subr.mxu0 0.0
    %3022 = vmatpush1.msra.mxu0 0.0
    %3023 = vmatprep.subr.mxu0 0.0
    %3024 = vmatpush1.msra.mxu0 0.0
    %3025 = vmatprep.subr.mxu0 0.0
    %3026 = vmatpush1.msra.mxu0 0.0
    %3027 = vmatprep.subr.mxu0 0.0
    %3028 = vmatpush1.msra.mxu0 0.0
    %3029 = vmatprep.subr.mxu0 0.0
    %3030 = vmatpush1.msra.mxu0 0.0
    %3031 = vmatprep.mubr.f32.mxu0 0.0
    %3032 = vmatmul.mubr.f32.gmra.mrb[0].mxu0 %v2965
    %v3033 = vpop.f32.mrb[0].mxu0
    %v3034 = vadd.f32 %v2961, %v3033
    %v3035 = vpop.f32.mrb[0].mxu0
    %3036 = vdwg.mxu0
    %v3037 = vsub.f32 0.0, %v3034
    %v3038 = vmul.f32 %v3037, 1.442695
    %v3039 = vpow.pop %v3038
    %v3040 = vadd.f32 %v3039, 1.0
    %v3041 = vrcp.pop %v3040
    %3042 = vst.msk [vmem:[%s9] sm:$0xff] %vm2875, %v3041
    // Predicated region
    $region42: #{tpu_custom_call.1} parent=1 // pred_check
      _
    $region43: #{tpu_custom_call.1} parent=1 // pred_check_branch
      %3044 = sbr.rel (0) target = $region45
    $region44: #{tpu_custom_call.1} parent=1 // pred_region
      _
    $region45: #{tpu_custom_call.1} parent=1 // pred_fallthru
      _
    // Predicated region
    $region46: #{tpu_custom_call.1} parent=1 // pred_check
      _
    $region47: #{tpu_custom_call.1} parent=1 // pred_check_branch
      %3046 = sbr.rel (0) target = $region49
    $region48: #{tpu_custom_call.1} parent=1 // pred_region
      _
    $region49: #{tpu_custom_call.1} parent=1 // pred_fallthru
      _
    %3047 = vsyncpa [#allocation3], 1

</llo_original>
